<compile_context>
chip_gen: v7x
topology: tpu7x:2x2x1
jax: 0.10.0
libtpu: 0.0.40
codegen_flags: <defaults>
</compile_context>

<pallas_src>
import functools
import math

import jax
import jax.numpy as jnp
from jax.experimental import pallas as pl
from jax.experimental.pallas import tpu as pltpu

# Per-grid-step working set is a single image (few 100 KB..few MB), so 32 MiB
# scoped VMEM is safe on v5e / v6e / v7x.  Raise on v5e/v6e (128 MiB physical)
# only if feeding very large images.
_VMEM_LIMIT = 32 * 1024 * 1024
_EPS_CONV = 1e-8
_EPS_BN = 1e-5


def _round_up(x, m):
    return (x + m - 1) // m * m


# ----------------------------------------------------------------------------
# In-kernel Gaussian noise: counter-based hash -> 2 uniforms -> Box-Muller.
# Pure jnp (works under Mosaic and under interpret mode; no pltpu.prng_seed).
# ----------------------------------------------------------------------------
def _uniform01(idx_i32, seed_i32):
    x = (idx_i32 ^ seed_i32).astype(jnp.uint32)
    x = (x ^ (x >> 16)) * jnp.uint32(0x7FEB352D)
    x = (x ^ (x >> 15)) * jnp.uint32(0x846CA68B)
    x = x ^ (x >> 16)
    m = (x >> 9).astype(jnp.int32)                    # 23 random bits
    return (m.astype(jnp.float32) + 0.5) * jnp.float32(1.0 / (1 << 23))


def _std_normal(shape, base, seed_a, seed_b):
    r = jax.lax.broadcasted_iota(jnp.int32, shape, 0)
    c = jax.lax.broadcasted_iota(jnp.int32, shape, 1)
    idx = base + r * jnp.int32(shape[1]) + c
    u1 = _uniform01(idx, seed_a)
    u2 = _uniform01(idx, seed_b)
    rad = jnp.sqrt(-2.0 * jnp.log(u1))
    return rad * jnp.cos(jnp.float32(2.0 * math.pi) * u2)


def _roll_left(x, k):
    """Static left rotation along the lane axis (axis=1)."""
    if k == 0:
        return x
    return jnp.concatenate([x[:, k:], x[:, :k]], axis=1)


# ----------------------------------------------------------------------------
# Fused kernel: ReLU -> stochastic (K,1) conv -> stochastic (1,K) conv
#               -> BN partial statistics.   One grid step == one image.
# ----------------------------------------------------------------------------
def _fac_conv_kernel(seed_ref, x_ref, w1_ref, w2_ref,
                     y2_ref, ssum_ref, ssq_ref,
                     *, K, p, Wl, W1, W2, H1, H2, C1P, C_outP):
    n = pl.program_id(0)
    M1 = H1 * Wl
    M2 = H2 * Wl
    seed_a = seed_ref[0]
    seed_b = seed_ref[1]
    stride_noise = (C1P * M1 + C_outP * M2) & 0x7FFFFFFF
    base = n * jnp.int32(stride_noise)                # decorrelate images

    # ---- stage 1: ReLU + stochastic (K,1) conv along H ---------------------
    xr = jnp.maximum(x_ref[...], 0.0)                 # (C_in, Hp*Wl)
    xpk = jnp.concatenate([xr, xr * xr], axis=0)      # (2*C_in, Hp*Wl)  [x ; x^2]

    acc1 = jnp.zeros((2 * C1P, M1), jnp.float32)
    for k in range(K):                                # tap shift = whole rows
        rhs = xpk[:, k * Wl:k * Wl + M1]
        acc1 = acc1 + jnp.dot(w1_ref[k], rhs, preferred_element_type=jnp.float32)
    mu1, var1 = acc1[:C1P], acc1[C1P:]
    n1 = _std_normal((C1P, M1), base, seed_a, seed_b)
    y1 = mu1 + jnp.sqrt(_EPS_CONV + var1) * n1

    if p > 0:
        # columns that must act as conv2's exact-zero W padding
        col = jax.lax.broadcasted_iota(jnp.int32, (C1P, M1), 1) % jnp.int32(Wl)
        y1 = jnp.where((col >= p) & (col < p + W1), y1, 0.0)
        # conv2's H padding: p zero rows on top and bottom
        zpad = jnp.zeros((C1P, p * Wl), jnp.float32)
        y1 = jnp.concatenate([zpad, y1, zpad], axis=1)        # (C1P, H2*Wl)

    # ---- stage 2: stochastic (1,K) conv along W ----------------------------
    ypk = jnp.concatenate([y1, y1 * y1], axis=0)              # (2*C1P, M2)
    acc2 = jnp.zeros((2 * C_outP, M2), jnp.float32)
    for k in range(K):                                        # tap shift = lanes
        acc2 = acc2 + jnp.dot(w2_ref[k], _roll_left(ypk, k),
                              preferred_element_type=jnp.float32)
    mu2, var2 = acc2[:C_outP], acc2[C_outP:]
    n2 = _std_normal((C_outP, M2), base + jnp.int32((C1P * M1) & 0x7FFFFFFF),
                     seed_a, seed_b)
    y2 = mu2 + jnp.sqrt(_EPS_CONV + var2) * n2
    y2_ref[...] = y2

    # ---- fused BatchNorm partial statistics (per image, valid columns) -----
    if W2 < Wl:
        col2 = jax.lax.broadcasted_iota(jnp.int32, (C_outP, M2), 1) % jnp.int32(Wl)
        yv = jnp.where(col2 < W2, y2, 0.0)
    else:
        yv = y2
    ssum_ref[...] = jnp.sum(yv, axis=1, keepdims=True)
    ssq_ref[...] = jnp.sum(yv * yv, axis=1, keepdims=True)


# ----------------------------------------------------------------------------
# BatchNorm apply: single FMA per element, writes the final layout directly.
# ----------------------------------------------------------------------------
def _bn_apply_kernel(y_ref, scale_ref, bias_ref, o_ref, *, C_out, W2):
    y = y_ref[:C_out, :, :W2]                                  # drop padding
    o_ref[...] = y * scale_ref[...] + bias_ref[...]


# ----------------------------------------------------------------------------
# Wrapper-side weight packing.
# ----------------------------------------------------------------------------
def _pack_blockdiag(w_ock, log_sigma_ock, rows_pad, cols_pad):
    """(O, C, K) torch weights -> (K, 2*rows_pad, 2*cols_pad) block-diagonal
    [[w_k, 0], [0, 0.01 + exp(2*log_sigma)_k]] per tap, zero-padded so the
    mu and var matmuls run as one MXU pass per tap."""
    o, c, k = w_ock.shape
    wvar = 0.01 + jnp.exp(2.0 * log_sigma_ock)
    lhs = jnp.zeros((k, 2 * rows_pad, 2 * cols_pad), jnp.float32)
    lhs = lhs.at[:, :o, :c].set(jnp.transpose(w_ock, (2, 0, 1)).astype(jnp.float32))
    lhs = lhs.at[:, rows_pad:rows_pad + o, cols_pad:cols_pad + c].set(
        jnp.transpose(wvar, (2, 0, 1)).astype(jnp.float32))
    return lhs


# ----------------------------------------------------------------------------
# FacConv parameters + forward
# ----------------------------------------------------------------------------
def init_fac_conv_params(key, C_in, C_out, K):
    """Synthetic init (PyTorch layouts: conv weight = (O, C, kH, kW))."""
    k1, k2 = jax.random.split(key)
    scale = 1.0 / jnp.sqrt(float(C_in * K))
    return dict(
        w1=jax.random.normal(k1, (C_in, C_in, K, 1), jnp.float32) * scale,
        ls1=jnp.full((C_in, C_in, K, 1), -3.0, jnp.float32),
        w2=jax.random.normal(k2, (C_out, C_in, 1, K), jnp.float32) * scale,
        ls2=jnp.full((C_out, C_in, 1, K), -3.0, jnp.float32),
        gamma=jnp.ones((C_out,), jnp.float32),   # affine=True init
        beta=jnp.zeros((C_out,), jnp.float32),
    )


def fac_conv_forward(x, params, noise_key, *, kernel_length, stride, padding):
    """FacConv.forward: ReLU -> LocalVarConv2d(Kx1) -> LocalVarConv2d(1xK) -> BN."""
    assert stride == 1  # TODO(synk): stride > 1 not implemented in the Pallas path
    K = kernel_length
    p = padding
    N, C_in, H, W = x.shape
    C_out = params["w2"].shape[0]

    # shared flat layout: row stride Wl holds both convs' W padding
    Wl = W + 4 * p
    Hp = H + 2 * p
    H1 = Hp - K + 1                 # conv1 output rows
    H2 = H1 + 2 * p                 # conv2 output rows (== final H)
    W1 = W + 2 * p                  # conv1 output (valid) width
    W2 = W1 + 2 * p - K + 1         # conv2 output width (== final W)
    C1P = _round_up(C_in, 8)
    C_outP = _round_up(C_out, 8)
    M2 = H2 * Wl

    seeds = jax.random.randint(noise_key, (2,), jnp.iinfo(jnp.int32).min,
                               jnp.iinfo(jnp.int32).max, dtype=jnp.int32)

    w1 = _pack_blockdiag(params["w1"][:, :, :, 0], params["ls1"][:, :, :, 0],
                         C1P, C_in)
    w2 = _pack_blockdiag(params["w2"][:, :, 0, :], params["ls2"][:, :, 0, :],
                         C_outP, C1P)

    # channels-first; x data sits at columns [2p, 2p+W) of each Wl-wide row
    xp = jnp.pad(x, ((0, 0), (0, 0), (p, p), (2 * p, 2 * p)))
    x_flat = xp.reshape(N, C_in, Hp * Wl)

    conv_kernel = functools.partial(
        _fac_conv_kernel, K=K, p=p, Wl=Wl, W1=W1, W2=W2, H1=H1, H2=H2,
        C1P=C1P, C_outP=C_outP)

    y2, ssum, ssq = pl.pallas_call(
        conv_kernel,
        out_shape=(jax.ShapeDtypeStruct((N, C_outP, M2), jnp.float32),
                   jax.ShapeDtypeStruct((N, C_outP, 1), jnp.float32),
                   jax.ShapeDtypeStruct((N, C_outP, 1), jnp.float32)),
        grid=(N,),
        in_specs=[
            pl.BlockSpec(memory_space=pltpu.MemorySpace.SMEM),             # seeds
            pl.BlockSpec((None, C_in, Hp * Wl), lambda n: (n, 0, 0)),      # x image
            pl.BlockSpec((K, 2 * C1P, 2 * C_in), lambda n: (0, 0, 0)),     # w1 (resident)
            pl.BlockSpec((K, 2 * C_outP, 2 * C1P), lambda n: (0, 0, 0)),   # w2 (resident)
        ],
        out_specs=(
            pl.BlockSpec((None, C_outP, M2), lambda n: (n, 0, 0)),         # pre-BN y2
            pl.BlockSpec((None, C_outP, 1), lambda n: (n, 0, 0)),          # BN partial sum
            pl.BlockSpec((None, C_outP, 1), lambda n: (n, 0, 0)),          # BN partial sumsq
        ),
        compiler_params=pltpu.CompilerParams(
            dimension_semantics=("parallel",),
            vmem_limit_bytes=_VMEM_LIMIT),
    )(seeds, x_flat, w1, w2)

    # ---- BatchNorm2d, training-mode batch statistics (tiny reduction) ------
    # TODO(synk): running_mean / running_var are not tracked (forward-only).
    cnt = float(N * H2 * W2)
    tot = jnp.sum(ssum[:, :, 0], axis=0)[:C_out]
    tot2 = jnp.sum(ssq[:, :, 0], axis=0)[:C_out]
    mean = tot / cnt
    var = jnp.maximum(tot2 / cnt - mean * mean, 0.0)     # biased, as torch BN
    scale = params["gamma"].astype(jnp.float32) * jax.lax.rsqrt(var + _EPS_BN)
    bias = params["beta"].astype(jnp.float32) - mean * scale
    scale3 = scale.reshape(C_out, 1, 1)
    bias3 = bias.reshape(C_out, 1, 1)

    y2_4d = y2.reshape(N, C_outP, H2, Wl)                # free (contiguous split)

    out = pl.pallas_call(
        functools.partial(_bn_apply_kernel, C_out=C_out, W2=W2),
        out_shape=jax.ShapeDtypeStruct((N, C_out, H2, W2), jnp.float32),
        grid=(N,),
        in_specs=[
            pl.BlockSpec((None, C_outP, H2, Wl), lambda n: (n, 0, 0, 0)),
            pl.BlockSpec((C_out, 1, 1), lambda n: (0, 0, 0)),
            pl.BlockSpec((C_out, 1, 1), lambda n: (0, 0, 0)),
        ],
        out_specs=pl.BlockSpec((None, C_out, H2, W2), lambda n: (n, 0, 0, 0)),
        compiler_params=pltpu.CompilerParams(
            dimension_semantics=("parallel",),
            vmem_limit_bytes=_VMEM_LIMIT),
    )(y2_4d, scale3, bias3)
    return out


# ----------------------------------------------------------------------------
if __name__ == "__main__":
    key = jax.random.PRNGKey(0)
    kp, kx, kn = jax.random.split(key, 3)

    C_in, C_out, K = 4, 8, 3
    stride, padding = 1, 0
    params = init_fac_conv_params(kp, C_in, C_out, K)

    x = jax.random.normal(kx, (2, C_in, 16, 16), jnp.float32)
    fwd = jax.jit(functools.partial(fac_conv_forward, kernel_length=K,
                                    stride=stride, padding=padding))
    out = jax.block_until_ready(fwd(x, params, kn))

    assert out.shape == (2, C_out, 14, 14), out.shape
    assert bool(jnp.all(jnp.isfinite(out)))
    # BatchNorm sanity: per-channel batch mean ~ 0, variance ~ 1 (gamma=1, beta=0).
    ch_mean = jnp.mean(out, axis=(0, 2, 3))
    ch_var = jnp.var(out, axis=(0, 2, 3))
    assert float(jnp.max(jnp.abs(ch_mean))) < 1e-2, ch_mean
    assert float(jnp.max(jnp.abs(ch_var - 1.0))) < 1e-2, ch_var
    print("KERNEL_OK")
</pallas_src>

<mosaic_0001>
module attributes {stable_mosaic.version = 11 : i64} {
  func.func @_fac_conv_kernel(%arg0: i32, %arg1: memref<2xi32, #tpu.memory_space<smem>>, %arg2: memref<1x4x256xf32, #tpu.memory_space<vmem>>, %arg3: memref<3x16x8xf32, #tpu.memory_space<vmem>>, %arg4: memref<3x16x16xf32, #tpu.memory_space<vmem>>, %arg5: memref<1x8x224xf32, #tpu.memory_space<vmem>>, %arg6: memref<1x8x1xf32, #tpu.memory_space<vmem>>, %arg7: memref<1x8x1xf32, #tpu.memory_space<vmem>>) attributes {dimension_semantics = [#tpu.dimension_semantics<parallel>], iteration_bounds = array<i64: 2>, scalar_prefetch = 0 : i64, scratch_operands = 0 : i64, tpu.core_type = #tpu.core_type<tc>, window_params = [{transform_indices = @transform_0, window_bounds = array<i64: 2>}, {transform_indices = @transform_1, window_bounds = array<i64: 1, 4, 256>}, {pipeline_mode = #tpu.pipeline_mode<synchronous>, transform_indices = @transform_2, window_bounds = array<i64: 3, 16, 8>}, {pipeline_mode = #tpu.pipeline_mode<synchronous>, transform_indices = @transform_3, window_bounds = array<i64: 3, 16, 16>}, {transform_indices = @transform_4, window_bounds = array<i64: 1, 8, 224>}, {transform_indices = @transform_5, window_bounds = array<i64: 1, 8, 1>}, {transform_indices = @transform_6, window_bounds = array<i64: 1, 8, 1>}]} {
    %c0 = arith.constant 0 : index
    %0 = memref.load %arg1[%c0] : memref<2xi32, #tpu.memory_space<smem>>
    %c1 = arith.constant 1 : index
    %1 = memref.load %arg1[%c1] : memref<2xi32, #tpu.memory_space<smem>>
    %c3584_i32 = arith.constant 3584 : i32
    %2 = arith.muli %arg0, %c3584_i32 : i32
    %c0_0 = arith.constant 0 : index
    %c0_1 = arith.constant 0 : index
    %c0_2 = arith.constant 0 : index
    %3 = vector.load %arg2[%c0_0, %c0_1, %c0_2] : memref<1x4x256xf32, #tpu.memory_space<vmem>>, vector<1x4x256xf32>
    %4 = vector.shape_cast %3 : vector<1x4x256xf32> to vector<4x256xf32>
    %cst = arith.constant 0.000000e+00 : f32
    %5 = vector.broadcast %cst : f32 to vector<4x256xf32>
    %6 = arith.maximumf %4, %5 : vector<4x256xf32>
    %7 = arith.mulf %6, %6 : vector<4x256xf32>
    %8 = tpu.concatenate %6, %7 in 0 : vector<4x256xf32>, vector<4x256xf32> -> vector<8x256xf32>
    %cst_3 = arith.constant 0.000000e+00 : f32
    %9 = vector.broadcast %cst_3 : f32 to vector<16x224xf32>
    %10 = vector.extract_strided_slice %8 {offsets = [0, 0], sizes = [8, 224], strides = [1, 1]} : vector<8x256xf32> to vector<8x224xf32>
    %c0_4 = arith.constant 0 : index
    %c0_5 = arith.constant 0 : index
    %c0_6 = arith.constant 0 : index
    %11 = vector.load %arg3[%c0_4, %c0_5, %c0_6] : memref<3x16x8xf32, #tpu.memory_space<vmem>>, vector<1x16x8xf32>
    %12 = vector.shape_cast %11 : vector<1x16x8xf32> to vector<16x8xf32>
    %cst_7 = arith.constant dense<0.000000e+00> : vector<16x224xf32>
    %13 = tpu.matmul %12, %10, %cst_7 {dimension_numbers = #tpu.dot_dimension_numbers<[1], [0], [0], [1], [0, 0, 1, 1], [], []>} : vector<16x8xf32>, vector<8x224xf32>, vector<16x224xf32> -> vector<16x224xf32>
    %14 = arith.addf %9, %13 : vector<16x224xf32>
    %15 = vector.extract_strided_slice %8 {offsets = [0, 16], sizes = [8, 224], strides = [1, 1]} : vector<8x256xf32> to vector<8x224xf32>
    %c1_8 = arith.constant 1 : index
    %c0_9 = arith.constant 0 : index
    %c0_10 = arith.constant 0 : index
    %16 = vector.load %arg3[%c1_8, %c0_9, %c0_10] : memref<3x16x8xf32, #tpu.memory_space<vmem>>, vector<1x16x8xf32>
    %17 = vector.shape_cast %16 : vector<1x16x8xf32> to vector<16x8xf32>
    %cst_11 = arith.constant dense<0.000000e+00> : vector<16x224xf32>
    %18 = tpu.matmul %17, %15, %cst_11 {dimension_numbers = #tpu.dot_dimension_numbers<[1], [0], [0], [1], [0, 0, 1, 1], [], []>} : vector<16x8xf32>, vector<8x224xf32>, vector<16x224xf32> -> vector<16x224xf32>
    %19 = arith.addf %14, %18 : vector<16x224xf32>
    %20 = vector.extract_strided_slice %8 {offsets = [0, 32], sizes = [8, 224], strides = [1, 1]} : vector<8x256xf32> to vector<8x224xf32>
    %c2 = arith.constant 2 : index
    %c0_12 = arith.constant 0 : index
    %c0_13 = arith.constant 0 : index
    %21 = vector.load %arg3[%c2, %c0_12, %c0_13] : memref<3x16x8xf32, #tpu.memory_space<vmem>>, vector<1x16x8xf32>
    %22 = vector.shape_cast %21 : vector<1x16x8xf32> to vector<16x8xf32>
    %cst_14 = arith.constant dense<0.000000e+00> : vector<16x224xf32>
    %23 = tpu.matmul %22, %20, %cst_14 {dimension_numbers = #tpu.dot_dimension_numbers<[1], [0], [0], [1], [0, 0, 1, 1], [], []>} : vector<16x8xf32>, vector<8x224xf32>, vector<16x224xf32> -> vector<16x224xf32>
    %24 = arith.addf %19, %23 : vector<16x224xf32>
    %25 = vector.extract_strided_slice %24 {offsets = [0, 0], sizes = [8, 224], strides = [1, 1]} : vector<16x224xf32> to vector<8x224xf32>
    %26 = vector.extract_strided_slice %24 {offsets = [8, 0], sizes = [8, 224], strides = [1, 1]} : vector<16x224xf32> to vector<8x224xf32>
    %27 = tpu.iota {dimensions = array<i32: 0>} : vector<8x224xi32>
    %28 = tpu.iota {dimensions = array<i32: 1>} : vector<8x224xi32>
    %c224_i32 = arith.constant 224 : i32
    %29 = vector.broadcast %c224_i32 : i32 to vector<8x224xi32>
    %30 = arith.muli %27, %29 : vector<8x224xi32>
    %31 = vector.broadcast %2 : i32 to vector<8x224xi32>
    %32 = arith.addi %31, %30 : vector<8x224xi32>
    %33 = arith.addi %32, %28 : vector<8x224xi32>
    %34 = vector.broadcast %0 : i32 to vector<8x224xi32>
    %35 = arith.xori %33, %34 : vector<8x224xi32>
    %c16_i32 = arith.constant 16 : i32
    %36 = vector.broadcast %c16_i32 : i32 to vector<8x224xi32>
    %37 = arith.shrui %35, %36 : vector<8x224xi32>
    %38 = arith.xori %35, %37 : vector<8x224xi32>
    %c2146121005_i32 = arith.constant 2146121005 : i32
    %39 = vector.broadcast %c2146121005_i32 : i32 to vector<8x224xi32>
    %40 = arith.muli %38, %39 : vector<8x224xi32>
    %c15_i32 = arith.constant 15 : i32
    %41 = vector.broadcast %c15_i32 : i32 to vector<8x224xi32>
    %42 = arith.shrui %40, %41 : vector<8x224xi32>
    %43 = arith.xori %40, %42 : vector<8x224xi32>
    %c-2073254261_i32 = arith.constant -2073254261 : i32
    %44 = vector.broadcast %c-2073254261_i32 : i32 to vector<8x224xi32>
    %45 = arith.muli %43, %44 : vector<8x224xi32>
    %c16_i32_15 = arith.constant 16 : i32
    %46 = vector.broadcast %c16_i32_15 : i32 to vector<8x224xi32>
    %47 = arith.shrui %45, %46 : vector<8x224xi32>
    %48 = arith.xori %45, %47 : vector<8x224xi32>
    %c9_i32 = arith.constant 9 : i32
    %49 = vector.broadcast %c9_i32 : i32 to vector<8x224xi32>
    %50 = arith.shrui %48, %49 : vector<8x224xi32>
    %51 = arith.sitofp %50 : vector<8x224xi32> to vector<8x224xf32>
    %cst_16 = arith.constant 5.000000e-01 : f32
    %52 = vector.broadcast %cst_16 : f32 to vector<8x224xf32>
    %53 = arith.addf %51, %52 : vector<8x224xf32>
    %cst_17 = arith.constant 1.1920929E-7 : f32
    %54 = vector.broadcast %cst_17 : f32 to vector<8x224xf32>
    %55 = arith.mulf %53, %54 : vector<8x224xf32>
    %56 = vector.broadcast %1 : i32 to vector<8x224xi32>
    %57 = arith.xori %33, %56 : vector<8x224xi32>
    %c16_i32_18 = arith.constant 16 : i32
    %58 = vector.broadcast %c16_i32_18 : i32 to vector<8x224xi32>
    %59 = arith.shrui %57, %58 : vector<8x224xi32>
    %60 = arith.xori %57, %59 : vector<8x224xi32>
    %c2146121005_i32_19 = arith.constant 2146121005 : i32
    %61 = vector.broadcast %c2146121005_i32_19 : i32 to vector<8x224xi32>
    %62 = arith.muli %60, %61 : vector<8x224xi32>
    %c15_i32_20 = arith.constant 15 : i32
    %63 = vector.broadcast %c15_i32_20 : i32 to vector<8x224xi32>
    %64 = arith.shrui %62, %63 : vector<8x224xi32>
    %65 = arith.xori %62, %64 : vector<8x224xi32>
    %c-2073254261_i32_21 = arith.constant -2073254261 : i32
    %66 = vector.broadcast %c-2073254261_i32_21 : i32 to vector<8x224xi32>
    %67 = arith.muli %65, %66 : vector<8x224xi32>
    %c16_i32_22 = arith.constant 16 : i32
    %68 = vector.broadcast %c16_i32_22 : i32 to vector<8x224xi32>
    %69 = arith.shrui %67, %68 : vector<8x224xi32>
    %70 = arith.xori %67, %69 : vector<8x224xi32>
    %c9_i32_23 = arith.constant 9 : i32
    %71 = vector.broadcast %c9_i32_23 : i32 to vector<8x224xi32>
    %72 = arith.shrui %70, %71 : vector<8x224xi32>
    %73 = arith.sitofp %72 : vector<8x224xi32> to vector<8x224xf32>
    %cst_24 = arith.constant 5.000000e-01 : f32
    %74 = vector.broadcast %cst_24 : f32 to vector<8x224xf32>
    %75 = arith.addf %73, %74 : vector<8x224xf32>
    %cst_25 = arith.constant 1.1920929E-7 : f32
    %76 = vector.broadcast %cst_25 : f32 to vector<8x224xf32>
    %77 = arith.mulf %75, %76 : vector<8x224xf32>
    %78 = math.log %55 : vector<8x224xf32>
    %cst_26 = arith.constant -2.000000e+00 : f32
    %79 = vector.broadcast %cst_26 : f32 to vector<8x224xf32>
    %80 = arith.mulf %79, %78 : vector<8x224xf32>
    %81 = math.sqrt %80 : vector<8x224xf32>
    %cst_27 = arith.constant 6.28318548 : f32
    %82 = vector.broadcast %cst_27 : f32 to vector<8x224xf32>
    %83 = arith.mulf %82, %77 : vector<8x224xf32>
    %84 = math.cos %83 : vector<8x224xf32>
    %85 = arith.mulf %81, %84 : vector<8x224xf32>
    %cst_28 = arith.constant 9.99999993E-9 : f32
    %86 = vector.broadcast %cst_28 : f32 to vector<8x224xf32>
    %87 = arith.addf %86, %26 : vector<8x224xf32>
    %88 = math.sqrt %87 : vector<8x224xf32>
    %89 = arith.mulf %88, %85 : vector<8x224xf32>
    %90 = arith.addf %25, %89 : vector<8x224xf32>
    %91 = arith.mulf %90, %90 : vector<8x224xf32>
    %92 = tpu.concatenate %90, %91 in 0 : vector<8x224xf32>, vector<8x224xf32> -> vector<16x224xf32>
    %cst_29 = arith.constant 0.000000e+00 : f32
    %93 = vector.broadcast %cst_29 : f32 to vector<16x224xf32>
    %c0_30 = arith.constant 0 : index
    %c0_31 = arith.constant 0 : index
    %c0_32 = arith.constant 0 : index
    %94 = vector.load %arg4[%c0_30, %c0_31, %c0_32] : memref<3x16x16xf32, #tpu.memory_space<vmem>>, vector<1x16x16xf32>
    %95 = vector.shape_cast %94 : vector<1x16x16xf32> to vector<16x16xf32>
    %cst_33 = arith.constant dense<0.000000e+00> : vector<16x224xf32>
    %96 = tpu.matmul %95, %92, %cst_33 {dimension_numbers = #tpu.dot_dimension_numbers<[1], [0], [0], [1], [0, 0, 1, 1], [], []>} : vector<16x16xf32>, vector<16x224xf32>, vector<16x224xf32> -> vector<16x224xf32>
    %97 = arith.addf %93, %96 : vector<16x224xf32>
    %c1_34 = arith.constant 1 : index
    %c0_35 = arith.constant 0 : index
    %c0_36 = arith.constant 0 : index
    %98 = vector.load %arg4[%c1_34, %c0_35, %c0_36] : memref<3x16x16xf32, #tpu.memory_space<vmem>>, vector<1x16x16xf32>
    %99 = vector.shape_cast %98 : vector<1x16x16xf32> to vector<16x16xf32>
    %100 = vector.extract_strided_slice %92 {offsets = [0, 1], sizes = [16, 223], strides = [1, 1]} : vector<16x224xf32> to vector<16x223xf32>
    %101 = vector.extract_strided_slice %92 {offsets = [0, 0], sizes = [16, 1], strides = [1, 1]} : vector<16x224xf32> to vector<16x1xf32>
    %102 = tpu.concatenate %100, %101 in 1 : vector<16x223xf32>, vector<16x1xf32> -> vector<16x224xf32>
    %cst_37 = arith.constant dense<0.000000e+00> : vector<16x224xf32>
    %103 = tpu.matmul %99, %102, %cst_37 {dimension_numbers = #tpu.dot_dimension_numbers<[1], [0], [0], [1], [0, 0, 1, 1], [], []>} : vector<16x16xf32>, vector<16x224xf32>, vector<16x224xf32> -> vector<16x224xf32>
    %104 = arith.addf %97, %103 : vector<16x224xf32>
    %c2_38 = arith.constant 2 : index
    %c0_39 = arith.constant 0 : index
    %c0_40 = arith.constant 0 : index
    %105 = vector.load %arg4[%c2_38, %c0_39, %c0_40] : memref<3x16x16xf32, #tpu.memory_space<vmem>>, vector<1x16x16xf32>
    %106 = vector.shape_cast %105 : vector<1x16x16xf32> to vector<16x16xf32>
    %107 = vector.extract_strided_slice %92 {offsets = [0, 2], sizes = [16, 222], strides = [1, 1]} : vector<16x224xf32> to vector<16x222xf32>
    %108 = vector.extract_strided_slice %92 {offsets = [0, 0], sizes = [16, 2], strides = [1, 1]} : vector<16x224xf32> to vector<16x2xf32>
    %109 = tpu.concatenate %107, %108 in 1 : vector<16x222xf32>, vector<16x2xf32> -> vector<16x224xf32>
    %cst_41 = arith.constant dense<0.000000e+00> : vector<16x224xf32>
    %110 = tpu.matmul %106, %109, %cst_41 {dimension_numbers = #tpu.dot_dimension_numbers<[1], [0], [0], [1], [0, 0, 1, 1], [], []>} : vector<16x16xf32>, vector<16x224xf32>, vector<16x224xf32> -> vector<16x224xf32>
    %111 = arith.addf %104, %110 : vector<16x224xf32>
    %112 = vector.extract_strided_slice %111 {offsets = [0, 0], sizes = [8, 224], strides = [1, 1]} : vector<16x224xf32> to vector<8x224xf32>
    %113 = vector.extract_strided_slice %111 {offsets = [8, 0], sizes = [8, 224], strides = [1, 1]} : vector<16x224xf32> to vector<8x224xf32>
    %c1792_i32 = arith.constant 1792 : i32
    %114 = arith.addi %2, %c1792_i32 : i32
    %115 = tpu.iota {dimensions = array<i32: 0>} : vector<8x224xi32>
    %116 = tpu.iota {dimensions = array<i32: 1>} : vector<8x224xi32>
    %c224_i32_42 = arith.constant 224 : i32
    %117 = vector.broadcast %c224_i32_42 : i32 to vector<8x224xi32>
    %118 = arith.muli %115, %117 : vector<8x224xi32>
    %119 = vector.broadcast %114 : i32 to vector<8x224xi32>
    %120 = arith.addi %119, %118 : vector<8x224xi32>
    %121 = arith.addi %120, %116 : vector<8x224xi32>
    %122 = vector.broadcast %0 : i32 to vector<8x224xi32>
    %123 = arith.xori %121, %122 : vector<8x224xi32>
    %c16_i32_43 = arith.constant 16 : i32
    %124 = vector.broadcast %c16_i32_43 : i32 to vector<8x224xi32>
    %125 = arith.shrui %123, %124 : vector<8x224xi32>
    %126 = arith.xori %123, %125 : vector<8x224xi32>
    %c2146121005_i32_44 = arith.constant 2146121005 : i32
    %127 = vector.broadcast %c2146121005_i32_44 : i32 to vector<8x224xi32>
    %128 = arith.muli %126, %127 : vector<8x224xi32>
    %c15_i32_45 = arith.constant 15 : i32
    %129 = vector.broadcast %c15_i32_45 : i32 to vector<8x224xi32>
    %130 = arith.shrui %128, %129 : vector<8x224xi32>
    %131 = arith.xori %128, %130 : vector<8x224xi32>
    %c-2073254261_i32_46 = arith.constant -2073254261 : i32
    %132 = vector.broadcast %c-2073254261_i32_46 : i32 to vector<8x224xi32>
    %133 = arith.muli %131, %132 : vector<8x224xi32>
    %c16_i32_47 = arith.constant 16 : i32
    %134 = vector.broadcast %c16_i32_47 : i32 to vector<8x224xi32>
    %135 = arith.shrui %133, %134 : vector<8x224xi32>
    %136 = arith.xori %133, %135 : vector<8x224xi32>
    %c9_i32_48 = arith.constant 9 : i32
    %137 = vector.broadcast %c9_i32_48 : i32 to vector<8x224xi32>
    %138 = arith.shrui %136, %137 : vector<8x224xi32>
    %139 = arith.sitofp %138 : vector<8x224xi32> to vector<8x224xf32>
    %cst_49 = arith.constant 5.000000e-01 : f32
    %140 = vector.broadcast %cst_49 : f32 to vector<8x224xf32>
    %141 = arith.addf %139, %140 : vector<8x224xf32>
    %cst_50 = arith.constant 1.1920929E-7 : f32
    %142 = vector.broadcast %cst_50 : f32 to vector<8x224xf32>
    %143 = arith.mulf %141, %142 : vector<8x224xf32>
    %144 = vector.broadcast %1 : i32 to vector<8x224xi32>
    %145 = arith.xori %121, %144 : vector<8x224xi32>
    %c16_i32_51 = arith.constant 16 : i32
    %146 = vector.broadcast %c16_i32_51 : i32 to vector<8x224xi32>
    %147 = arith.shrui %145, %146 : vector<8x224xi32>
    %148 = arith.xori %145, %147 : vector<8x224xi32>
    %c2146121005_i32_52 = arith.constant 2146121005 : i32
    %149 = vector.broadcast %c2146121005_i32_52 : i32 to vector<8x224xi32>
    %150 = arith.muli %148, %149 : vector<8x224xi32>
    %c15_i32_53 = arith.constant 15 : i32
    %151 = vector.broadcast %c15_i32_53 : i32 to vector<8x224xi32>
    %152 = arith.shrui %150, %151 : vector<8x224xi32>
    %153 = arith.xori %150, %152 : vector<8x224xi32>
    %c-2073254261_i32_54 = arith.constant -2073254261 : i32
    %154 = vector.broadcast %c-2073254261_i32_54 : i32 to vector<8x224xi32>
    %155 = arith.muli %153, %154 : vector<8x224xi32>
    %c16_i32_55 = arith.constant 16 : i32
    %156 = vector.broadcast %c16_i32_55 : i32 to vector<8x224xi32>
    %157 = arith.shrui %155, %156 : vector<8x224xi32>
    %158 = arith.xori %155, %157 : vector<8x224xi32>
    %c9_i32_56 = arith.constant 9 : i32
    %159 = vector.broadcast %c9_i32_56 : i32 to vector<8x224xi32>
    %160 = arith.shrui %158, %159 : vector<8x224xi32>
    %161 = arith.sitofp %160 : vector<8x224xi32> to vector<8x224xf32>
    %cst_57 = arith.constant 5.000000e-01 : f32
    %162 = vector.broadcast %cst_57 : f32 to vector<8x224xf32>
    %163 = arith.addf %161, %162 : vector<8x224xf32>
    %cst_58 = arith.constant 1.1920929E-7 : f32
    %164 = vector.broadcast %cst_58 : f32 to vector<8x224xf32>
    %165 = arith.mulf %163, %164 : vector<8x224xf32>
    %166 = math.log %143 : vector<8x224xf32>
    %cst_59 = arith.constant -2.000000e+00 : f32
    %167 = vector.broadcast %cst_59 : f32 to vector<8x224xf32>
    %168 = arith.mulf %167, %166 : vector<8x224xf32>
    %169 = math.sqrt %168 : vector<8x224xf32>
    %cst_60 = arith.constant 6.28318548 : f32
    %170 = vector.broadcast %cst_60 : f32 to vector<8x224xf32>
    %171 = arith.mulf %170, %165 : vector<8x224xf32>
    %172 = math.cos %171 : vector<8x224xf32>
    %173 = arith.mulf %169, %172 : vector<8x224xf32>
    %cst_61 = arith.constant 9.99999993E-9 : f32
    %174 = vector.broadcast %cst_61 : f32 to vector<8x224xf32>
    %175 = arith.addf %174, %113 : vector<8x224xf32>
    %176 = math.sqrt %175 : vector<8x224xf32>
    %177 = arith.mulf %176, %173 : vector<8x224xf32>
    %178 = arith.addf %112, %177 : vector<8x224xf32>
    %c0_62 = arith.constant 0 : index
    %c0_63 = arith.constant 0 : index
    %c0_64 = arith.constant 0 : index
    %179 = vector.load %arg5[%c0_62, %c0_63, %c0_64] : memref<1x8x224xf32, #tpu.memory_space<vmem>>, vector<1x8x224xf32>
    %180 = vector.shape_cast %179 : vector<1x8x224xf32> to vector<8x224xf32>
    %181 = vector.shape_cast %178 : vector<8x224xf32> to vector<1x8x224xf32>
    tpu.vector_store %arg5[%c0_62, %c0_63, %c0_64], %181 {strides = array<i32>} : memref<1x8x224xf32, #tpu.memory_space<vmem>>, vector<1x8x224xf32>,
    %182 = tpu.iota {dimensions = array<i32: 1>} : vector<8x224xi32>
    %c16_i32_65 = arith.constant 16 : i32
    %c0_i32 = arith.constant 0 : i32
    %183 = arith.cmpi eq, %c16_i32_65, %c0_i32 : i32
    %c1_i32 = arith.constant 1 : i32
    %184 = arith.select %183, %c1_i32, %c16_i32_65 : i32
    %185 = vector.broadcast %184 : i32 to vector<8x224xi32>
    %186 = arith.remsi %182, %185 : vector<8x224xi32>
    %c0_i32_66 = arith.constant 0 : i32
    %187 = vector.broadcast %c0_i32_66 : i32 to vector<8x224xi32>
    %188 = arith.cmpi ne, %186, %187 : vector<8x224xi32>
    %c0_i32_67 = arith.constant 0 : i32
    %189 = vector.broadcast %c0_i32_67 : i32 to vector<8x224xi32>
    %190 = arith.cmpi slt, %186, %189 : vector<8x224xi32>
    %c0_i32_68 = arith.constant 0 : i32
    %191 = arith.cmpi slt, %184, %c0_i32_68 : i32
    %192 = vector.broadcast %191 : i1 to vector<8x224xi1>
    %193 = vector.broadcast %192 : vector<8x224xi1> to vector<8x224xi1>
    %194 = arith.xori %190, %193 : vector<8x224xi1>
    %195 = arith.andi %194, %188 : vector<8x224xi1>
    %196 = vector.broadcast %184 : i32 to vector<8x224xi32>
    %197 = arith.addi %186, %196 : vector<8x224xi32>
    %198 = arith.select %195, %197, %186 : vector<8x224xi1>, vector<8x224xi32>
    %c14_i32 = arith.constant 14 : i32
    %199 = vector.broadcast %c14_i32 : i32 to vector<8x224xi32>
    %200 = arith.cmpi slt, %198, %199 : vector<8x224xi32>
    %cst_69 = arith.constant 0.000000e+00 : f32
    %201 = vector.broadcast %cst_69 : f32 to vector<8x224xf32>
    %202 = arith.select %200, %178, %201 : vector<8x224xi1>, vector<8x224xf32>
    %cst_70 = arith.constant dense<0.000000e+00> : vector<8xf32>
    %203 = vector.multi_reduction <add>, %202, %cst_70 [1] : vector<8x224xf32> to vector<8xf32>
    %204 = vector.shape_cast %203 : vector<8xf32> to vector<8x1xf32>
    %c0_71 = arith.constant 0 : index
    %c0_72 = arith.constant 0 : index
    %c0_73 = arith.constant 0 : index
    %205 = vector.load %arg6[%c0_71, %c0_72, %c0_73] : memref<1x8x1xf32, #tpu.memory_space<vmem>>, vector<1x8x1xf32>
    %206 = vector.shape_cast %205 : vector<1x8x1xf32> to vector<8x1xf32>
    %207 = vector.shape_cast %204 : vector<8x1xf32> to vector<1x8x1xf32>
    tpu.vector_store %arg6[%c0_71, %c0_72, %c0_73], %207 {strides = array<i32>} : memref<1x8x1xf32, #tpu.memory_space<vmem>>, vector<1x8x1xf32>,
    %208 = arith.mulf %202, %202 : vector<8x224xf32>
    %cst_74 = arith.constant dense<0.000000e+00> : vector<8xf32>
    %209 = vector.multi_reduction <add>, %208, %cst_74 [1] : vector<8x224xf32> to vector<8xf32>
    %210 = vector.shape_cast %209 : vector<8xf32> to vector<8x1xf32>
    %c0_75 = arith.constant 0 : index
    %c0_76 = arith.constant 0 : index
    %c0_77 = arith.constant 0 : index
    %211 = vector.load %arg7[%c0_75, %c0_76, %c0_77] : memref<1x8x1xf32, #tpu.memory_space<vmem>>, vector<1x8x1xf32>
    %212 = vector.shape_cast %211 : vector<1x8x1xf32> to vector<8x1xf32>
    %213 = vector.shape_cast %210 : vector<8x1xf32> to vector<1x8x1xf32>
    tpu.vector_store %arg7[%c0_75, %c0_76, %c0_77], %213 {strides = array<i32>} : memref<1x8x1xf32, #tpu.memory_space<vmem>>, vector<1x8x1xf32>,
    return
  }
  func.func @transform_0(%arg0: i32) -> i32 {
    %c0_i32 = arith.constant 0 : i32
    %c0_i32_0 = arith.constant 0 : i32
    return %c0_i32 : i32
  }
  func.func @transform_1(%arg0: i32) -> (i32, i32, i32) {
    %c0_i32 = arith.constant 0 : i32
    %c0_i32_0 = arith.constant 0 : i32
    %c0_i32_1 = arith.constant 0 : i32
    return %arg0, %c0_i32, %c0_i32_0 : i32, i32, i32
  }
  func.func @transform_2(%arg0: i32) -> (i32, i32, i32) {
    %c0_i32 = arith.constant 0 : i32
    %c0_i32_0 = arith.constant 0 : i32
    %c0_i32_1 = arith.constant 0 : i32
    %c0_i32_2 = arith.constant 0 : i32
    return %c0_i32, %c0_i32_0, %c0_i32_1 : i32, i32, i32
  }
  func.func @transform_3(%arg0: i32) -> (i32, i32, i32) {
    %c0_i32 = arith.constant 0 : i32
    %c0_i32_0 = arith.constant 0 : i32
    %c0_i32_1 = arith.constant 0 : i32
    %c0_i32_2 = arith.constant 0 : i32
    return %c0_i32, %c0_i32_0, %c0_i32_1 : i32, i32, i32
  }
  func.func @transform_4(%arg0: i32) -> (i32, i32, i32) {
    %c0_i32 = arith.constant 0 : i32
    %c0_i32_0 = arith.constant 0 : i32
    %c0_i32_1 = arith.constant 0 : i32
    return %arg0, %c0_i32, %c0_i32_0 : i32, i32, i32
  }
  func.func @transform_5(%arg0: i32) -> (i32, i32, i32) {
    %c0_i32 = arith.constant 0 : i32
    %c0_i32_0 = arith.constant 0 : i32
    %c0_i32_1 = arith.constant 0 : i32
    return %arg0, %c0_i32, %c0_i32_0 : i32, i32, i32
  }
  func.func @transform_6(%arg0: i32) -> (i32, i32, i32) {
    %c0_i32 = arith.constant 0 : i32
    %c0_i32_0 = arith.constant 0 : i32
    %c0_i32_1 = arith.constant 0 : i32
    return %arg0, %c0_i32, %c0_i32_0 : i32, i32, i32
  }
}

module attributes {stable_mosaic.version = 11 : i64} {
  func.func @_bn_apply_kernel(%arg0: i32, %arg1: memref<1x8x14x16xf32, #tpu.memory_space<vmem>>, %arg2: memref<8x1x1xf32, #tpu.memory_space<vmem>>, %arg3: memref<8x1x1xf32, #tpu.memory_space<vmem>>, %arg4: memref<1x8x14x14xf32, #tpu.memory_space<vmem>>) attributes {dimension_semantics = [#tpu.dimension_semantics<parallel>], iteration_bounds = array<i64: 2>, scalar_prefetch = 0 : i64, scratch_operands = 0 : i64, tpu.core_type = #tpu.core_type<tc>, window_params = [{transform_indices = @transform_0, window_bounds = array<i64: 1, 8, 14, 16>}, {pipeline_mode = #tpu.pipeline_mode<synchronous>, transform_indices = @transform_1, window_bounds = array<i64: 8, 1, 1>}, {pipeline_mode = #tpu.pipeline_mode<synchronous>, transform_indices = @transform_2, window_bounds = array<i64: 8, 1, 1>}, {transform_indices = @transform_3, window_bounds = array<i64: 1, 8, 14, 14>}]} {
    %c0 = arith.constant 0 : index
    %c0_0 = arith.constant 0 : index
    %c0_1 = arith.constant 0 : index
    %c0_2 = arith.constant 0 : index
    %0 = vector.load %arg1[%c0, %c0_0, %c0_1, %c0_2] : memref<1x8x14x16xf32, #tpu.memory_space<vmem>>, vector<1x8x14x14xf32>
    %1 = vector.shape_cast %0 : vector<1x8x14x14xf32> to vector<8x14x14xf32>
    %c0_3 = arith.constant 0 : index
    %c0_4 = arith.constant 0 : index
    %c0_5 = arith.constant 0 : index
    %2 = vector.load %arg2[%c0_3, %c0_4, %c0_5] : memref<8x1x1xf32, #tpu.memory_space<vmem>>, vector<8x1x1xf32>
    %3 = vector.broadcast %2 : vector<8x1x1xf32> to vector<8x14x14xf32>
    %4 = arith.mulf %1, %3 : vector<8x14x14xf32>
    %c0_6 = arith.constant 0 : index
    %c0_7 = arith.constant 0 : index
    %c0_8 = arith.constant 0 : index
    %5 = vector.load %arg3[%c0_6, %c0_7, %c0_8] : memref<8x1x1xf32, #tpu.memory_space<vmem>>, vector<8x1x1xf32>
    %6 = vector.broadcast %5 : vector<8x1x1xf32> to vector<8x14x14xf32>
    %7 = arith.addf %4, %6 : vector<8x14x14xf32>
    %c0_9 = arith.constant 0 : index
    %c0_10 = arith.constant 0 : index
    %c0_11 = arith.constant 0 : index
    %c0_12 = arith.constant 0 : index
    %8 = vector.load %arg4[%c0_9, %c0_10, %c0_11, %c0_12] : memref<1x8x14x14xf32, #tpu.memory_space<vmem>>, vector<1x8x14x14xf32>
    %9 = vector.shape_cast %8 : vector<1x8x14x14xf32> to vector<8x14x14xf32>
    %10 = vector.shape_cast %7 : vector<8x14x14xf32> to vector<1x8x14x14xf32>
    tpu.vector_store %arg4[%c0_9, %c0_10, %c0_11, %c0_12], %10 {strides = array<i32>} : memref<1x8x14x14xf32, #tpu.memory_space<vmem>>, vector<1x8x14x14xf32>,
    return
  }
  func.func @transform_0(%arg0: i32) -> (i32, i32, i32, i32) {
    %c0_i32 = arith.constant 0 : i32
    %c0_i32_0 = arith.constant 0 : i32
    %c0_i32_1 = arith.constant 0 : i32
    %c0_i32_2 = arith.constant 0 : i32
    return %arg0, %c0_i32, %c0_i32_0, %c0_i32_1 : i32, i32, i32, i32
  }
  func.func @transform_1(%arg0: i32) -> (i32, i32, i32) {
    %c0_i32 = arith.constant 0 : i32
    %c0_i32_0 = arith.constant 0 : i32
    %c0_i32_1 = arith.constant 0 : i32
    %c0_i32_2 = arith.constant 0 : i32
    return %c0_i32, %c0_i32_0, %c0_i32_1 : i32, i32, i32
  }
  func.func @transform_2(%arg0: i32) -> (i32, i32, i32) {
    %c0_i32 = arith.constant 0 : i32
    %c0_i32_0 = arith.constant 0 : i32
    %c0_i32_1 = arith.constant 0 : i32
    %c0_i32_2 = arith.constant 0 : i32
    return %c0_i32, %c0_i32_0, %c0_i32_1 : i32, i32, i32
  }
  func.func @transform_3(%arg0: i32) -> (i32, i32, i32, i32) {
    %c0_i32 = arith.constant 0 : i32
    %c0_i32_0 = arith.constant 0 : i32
    %c0_i32_1 = arith.constant 0 : i32
    %c0_i32_2 = arith.constant 0 : i32
    return %arg0, %c0_i32, %c0_i32_0, %c0_i32_1 : i32, i32, i32, i32
  }
}

</mosaic_0001>

<llo_original>
// kernel: fac_conv_forward.3
$region0: #{fac_conv_forward.3}
  #allocation0 [shape = 'u32[]', space=smem, size = 0x4, offset = 0x4, fixed_abs, tag = 'smem constant byte address 0x4 - core index']
  #allocation1 [shape = 'u32[144,128]{1,0:T(1,128)}', space=vmem, size = 0x12000, scoped, tag = 'internal scratch']
  %s0 = inlined_call_operand.vmem [shape: f32[2,8,14,16], index: 0, kind: input, shape index: {}]
  %s1 = inlined_call_operand.vmem [shape: f32[8,1,1], index: 1, kind: input, shape index: {}]
  %s2 = inlined_call_operand.vmem [shape: f32[8,1,1], index: 2, kind: input, shape index: {}]
  %s3 = inlined_call_operand.vmem [shape: f32[2,8,14,14], index: 3, kind: output, shape index: {}]
  %s4 = sld [smem:[#allocation0]]
  $region45: #{fac_conv_forward.3} parent=0
    _
  %s6 = ssub.s32 1, %s4
  %s7 = scalar_select 0, %s6, %s4
  loop: start=0, step=1, limit=4
  $region2: #{fac_conv_forward.3} parent=0 // loop_pre_header
    _
  $region3: #{fac_conv_forward.3} parent=0 // loop_header
    %s9 = sphi 0, %s13
    %p10 = scmp.ge.s32.totalorder %s9, 4
    %s19 = sphi 0, %s21
    %s22 = sphi 0, %s19
    %s23 = sphi 0, %s22
    %s39 = sphi 0, %s23
    %s43 = sphi 0, %s43
    %s45 = sphi 0, %s43
    %s46 = sphi 0, %s45
    %s60 = sphi 0, %s46
    %s64 = sphi 0, %s64
    %s66 = sphi 0, %s64
    %s67 = sphi 0, %s66
    %s81 = sphi 0, %s67
    %s87 = sphi 0, %s89
    %s90 = sphi 0, %s87
    %s91 = sphi 0, %s90
    %s107 = sphi 0, %s91
  $region4: #{fac_conv_forward.3} parent=0 // loop_header_branch
    %12 = sbr.rel (%p10) target = $region8
  $region5: #{fac_conv_forward.3} parent=0 // loop_body
    %s14 = ssub.s32 %s9, 1
    %s15 = ssub.s32 %s9, 2
    %s16 = sadd.s32 %s9, 1
    %s17 = ssub.s32 %s9, %s16
    %p18 = scmp.eq.s32.totalorder %s17, 0
    %s20 = sadd.s32 %s19, 1
    %s21 = scalar_select %p18, %s19, %s20
    %p24 = pneg %p18
    %p25 = scmp.eq.s32.totalorder %s9, 1
    %p26 = por %p24, %p25
    %p27 = scmp.ne.s32.totalorder %s19, %s22
    %p28 = scmp.eq.s32.totalorder %s9, 0
    %p29 = por %p27, %p28
    %p30 = scmp.ne.s32.totalorder %s19, %s22
    %p31 = scmp.eq.s32.totalorder %s14, 1
    %p32 = por %p30, %p31
    %p33 = scmp.ne.s32.totalorder %s22, %s23
    %p34 = scmp.eq.s32.totalorder %s14, 0
    %p35 = por %p33, %p34
    %p36 = scmp.ne.s32.totalorder %s22, %s23
    %p37 = scmp.eq.s32.totalorder %s15, 1
    %p38 = por %p36, %p37
    %p40 = scmp.ne.s32.totalorder %s23, %s39
    %p41 = scmp.eq.s32.totalorder %s15, 0
    %p42 = por %p40, %p41
    %s44 = sadd.s32 %s43, 1
    %p47 = scmp.eq.s32.totalorder %s9, 1
    %p48 = scmp.ne.s32.totalorder %s43, %s45
    %p49 = scmp.eq.s32.totalorder %s9, 0
    %p50 = por %p48, %p49
    %p51 = scmp.ne.s32.totalorder %s43, %s45
    %p52 = scmp.eq.s32.totalorder %s14, 1
    %p53 = por %p51, %p52
    %p54 = scmp.ne.s32.totalorder %s45, %s46
    %p55 = scmp.eq.s32.totalorder %s14, 0
    %p56 = por %p54, %p55
    %p57 = scmp.ne.s32.totalorder %s45, %s46
    %p58 = scmp.eq.s32.totalorder %s15, 1
    %p59 = por %p57, %p58
    %p61 = scmp.ne.s32.totalorder %s46, %s60
    %p62 = scmp.eq.s32.totalorder %s15, 0
    %p63 = por %p61, %p62
    %s65 = sadd.s32 %s64, 1
    %p68 = scmp.eq.s32.totalorder %s9, 1
    %p69 = scmp.ne.s32.totalorder %s64, %s66
    %p70 = scmp.eq.s32.totalorder %s9, 0
    %p71 = por %p69, %p70
    %p72 = scmp.ne.s32.totalorder %s64, %s66
    %p73 = scmp.eq.s32.totalorder %s14, 1
    %p74 = por %p72, %p73
    %p75 = scmp.ne.s32.totalorder %s66, %s67
    %p76 = scmp.eq.s32.totalorder %s14, 0
    %p77 = por %p75, %p76
    %p78 = scmp.ne.s32.totalorder %s66, %s67
    %p79 = scmp.eq.s32.totalorder %s15, 1
    %p80 = por %p78, %p79
    %p82 = scmp.ne.s32.totalorder %s67, %s81
    %p83 = scmp.eq.s32.totalorder %s15, 0
    %p84 = por %p82, %p83
    %s85 = ssub.s32 %s9, %s16
    %p86 = scmp.eq.s32.totalorder %s85, 0
    %s88 = sadd.s32 %s87, 1
    %s89 = scalar_select %p86, %s87, %s88
    %p92 = pneg %p86
    %p93 = scmp.eq.s32.totalorder %s9, 1
    %p94 = por %p92, %p93
    %p95 = scmp.ne.s32.totalorder %s87, %s90
    %p96 = scmp.eq.s32.totalorder %s9, 0
    %p97 = por %p95, %p96
    %p98 = scmp.ne.s32.totalorder %s87, %s90
    %p99 = scmp.eq.s32.totalorder %s14, 1
    %p100 = por %p98, %p99
    %p101 = scmp.ne.s32.totalorder %s90, %s91
    %p102 = scmp.eq.s32.totalorder %s14, 0
    %p103 = por %p101, %p102
    %p104 = scmp.ne.s32.totalorder %s90, %s91
    %p105 = scmp.eq.s32.totalorder %s15, 1
    %p106 = por %p104, %p105
    %p108 = scmp.ne.s32.totalorder %s91, %s107
    %p109 = scmp.eq.s32.totalorder %s15, 0
    %p110 = por %p108, %p109
    %p111 = scmp.le.s32.totalorder 1, %s9
    %p112 = scmp.lt.s32.totalorder %s9, 3
    %p113 = pnand %p111, %p112
    %p114 = pneg %p113
    // Predicated region
    $region9: #{fac_conv_forward.3} parent=5 // pred_check
      _
    $region10: #{fac_conv_forward.3} parent=5 // pred_check_branch
      %116 = sbr.rel (%p113) target = $region12
    $region11: #{fac_conv_forward.3} parent=5 // pred_region
      %s117 = ssub.s32 %s9, 1
      // Predicated region
      $region13: #{fac_conv_forward.3} parent=11 // pred_check
        %p118 = pneg %p56
      $region14: #{fac_conv_forward.3} parent=11 // pred_check_branch
        %120 = sbr.rel (%p118) target = $region16
      $region15: #{fac_conv_forward.3} parent=11 // pred_region
        _
      $region16: #{fac_conv_forward.3} parent=11 // pred_fallthru
        _
      // Predicated region
      $region17: #{fac_conv_forward.3} parent=11 // pred_check
        %p121 = pneg %p77
      $region18: #{fac_conv_forward.3} parent=11 // pred_check_branch
        %123 = sbr.rel (%p121) target = $region20
      $region19: #{fac_conv_forward.3} parent=11 // pred_region
        _
      $region20: #{fac_conv_forward.3} parent=11 // pred_fallthru
        _
    $region12: #{fac_conv_forward.3} parent=5 // pred_fallthru
      _
    %p124 = scmp.lt.s32.totalorder %s9, 2
    // Predicated region
    $region21: #{fac_conv_forward.3} parent=5 // pred_check
      %p125 = pneg %p124
    $region22: #{fac_conv_forward.3} parent=5 // pred_check_branch
      %127 = sbr.rel (%p125) target = $region24
    $region23: #{fac_conv_forward.3} parent=5 // pred_region
      // Predicated region
      $region25: #{fac_conv_forward.3} parent=23 // pred_check
        %p128 = pneg %p29
      $region26: #{fac_conv_forward.3} parent=23 // pred_check_branch
        %130 = sbr.rel (%p128) target = $region28
      $region27: #{fac_conv_forward.3} parent=23 // pred_region
        %p131 = scmp.lt.s32.totalorder %s9, 1
        %s132 = scalar_select %p131, %s9, 1
        %s133 = smul.addr %s132, 16
        %s134 = smul.addr %s133, 8
        %s135 = scalar_lea.vmem %s0, %s134
      $region28: #{fac_conv_forward.3} parent=23 // pred_fallthru
        _
    $region24: #{fac_conv_forward.3} parent=5 // pred_fallthru
      _
    %p136 = scmp.le.s32.totalorder 1, %s9
    %p137 = scmp.lt.s32.totalorder %s9, 3
    %p138 = pnand %p136, %p137
    %p139 = pneg %p138
    // Predicated region
    $region29: #{fac_conv_forward.3} parent=5 // pred_check
      _
    $region30: #{fac_conv_forward.3} parent=5 // pred_check_branch
      %141 = sbr.rel (%p138) target = $region32
    $region31: #{fac_conv_forward.3} parent=5 // pred_region
      %s142 = ssub.s32 %s9, 1
      %p143 = scmp.lt.s32.totalorder %s14, 1
      %s144 = scalar_select %p143, %s14, 1
      %s145 = smul.addr %s144, 16
      %s146 = smul.addr %s145, 8
      %s147 = scalar_lea.vmem %s0, %s146
      %p148 = pneg %p35
      %p149 = pneg %p32
      %p150 = pneg %p56
      %p151 = pneg %p53
      %p152 = pneg %p77
      %p153 = pneg %p74
      %p154 = pneg %p103
      %p155 = pneg %p100
      %p156 = scmp.lt.s32.totalorder %s14, 1
      %s157 = scalar_select %p156, %s14, 1
      %s158 = smul.addr %s157, 16
      %s159 = smul.addr %s158, 8
      %s160 = scalar_lea.vmem %s3, %s159
      %p161 = scmp.lt.s32.totalorder %s14, 1
      %s162 = scalar_select %p161, %s14, 1
      %s163 = smul.addr %s162, 16
      %s164 = smul.addr %s163, 8
      %s165 = scalar_lea.vmem %s0, %s164
      %p166 = scmp.lt.s32.totalorder %s14, 1
      %s167 = scalar_select %p166, %s14, 1
      %s168 = smul.addr %s167, 16
      %s169 = smul.addr %s168, 8
      %s170 = scalar_lea.vmem %s3, %s169
      %v171 = vld [vmem:[%s165] sm:$0xff]
      %v172 = vld [vmem:[%s165 + $0x8] sm:$0x3f]
      %v173 = vld [vmem:[%s165 + $0x10] sm:$0xff]
      %v174 = vld [vmem:[%s165 + $0x18] sm:$0x3f]
      %v175 = vld [vmem:[%s165 + $0x20] sm:$0xff]
      %v176 = vld [vmem:[%s165 + $0x28] sm:$0x3f]
      %v177 = vld [vmem:[%s165 + $0x30] sm:$0xff]
      %v178 = vld [vmem:[%s165 + $0x38] sm:$0x3f]
      %v179 = vld [vmem:[%s165 + $0x40] sm:$0xff]
      %v180 = vld [vmem:[%s165 + $0x48] sm:$0x3f]
      %v181 = vld [vmem:[%s165 + $0x50] sm:$0xff]
      %v182 = vld [vmem:[%s165 + $0x58] sm:$0x3f]
      %v183 = vld [vmem:[%s165 + $0x60] sm:$0xff]
      %v184 = vld [vmem:[%s165 + $0x68] sm:$0x3f]
      %v185 = vld [vmem:[%s165 + $0x70] sm:$0xff]
      %v186 = vld [vmem:[%s165 + $0x78] sm:$0x3f]
      %v187 = vld [vmem:[%s1] sm:$0x1]
      %v188 = vld [vmem:[%s1 + $0x1] sm:$0x1]
      %v189 = vld [vmem:[%s1 + $0x2] sm:$0x1]
      %v190 = vld [vmem:[%s1 + $0x3] sm:$0x1]
      %v191 = vld [vmem:[%s1 + $0x4] sm:$0x1]
      %v192 = vld [vmem:[%s1 + $0x5] sm:$0x1]
      %v193 = vld [vmem:[%s1 + $0x6] sm:$0x1]
      %v194 = vld [vmem:[%s1 + $0x7] sm:$0x1]
      %v203 = vlaneseq
      %v204 = vshrl.u32 %v203, 7
      %v205 = vsub.s32 0, %v204
      %v206 = vrot.slane %v187, %v205
      %v207 = vlaneseq
      %v208 = vshrl.u32 %v207, 7
      %v209 = vsub.s32 0, %v208
      %v210 = vrot.slane %v188, %v209
      %v211 = vlaneseq
      %v212 = vshrl.u32 %v211, 7
      %v213 = vsub.s32 0, %v212
      %v214 = vrot.slane %v189, %v213
      %v215 = vlaneseq
      %v216 = vshrl.u32 %v215, 7
      %v217 = vsub.s32 0, %v216
      %v218 = vrot.slane %v190, %v217
      %v219 = vlaneseq
      %v220 = vshrl.u32 %v219, 7
      %v221 = vsub.s32 0, %v220
      %v222 = vrot.slane %v191, %v221
      %v223 = vlaneseq
      %v224 = vshrl.u32 %v223, 7
      %v225 = vsub.s32 0, %v224
      %v226 = vrot.slane %v192, %v225
      %v227 = vlaneseq
      %v228 = vshrl.u32 %v227, 7
      %v229 = vsub.s32 0, %v228
      %v230 = vrot.slane %v193, %v229
      %v231 = vlaneseq
      %v232 = vshrl.u32 %v231, 7
      %v233 = vsub.s32 0, %v232
      %v234 = vrot.slane %v194, %v233
      %235 = vset.pattern.permute.xlu0 0
      %236 = vperm.xlu0 %235, %v206
      %v237 = vpop.permute.xlu0 %236
      %239 = vset.pattern.permute.xlu0 0
      %240 = vperm.xlu0 %239, %v210
      %v241 = vpop.permute.xlu0 %240
      %243 = vset.pattern.permute.xlu0 0
      %244 = vperm.xlu0 %243, %v214
      %v245 = vpop.permute.xlu0 %244
      %247 = vset.pattern.permute.xlu0 0
      %248 = vperm.xlu0 %247, %v218
      %v249 = vpop.permute.xlu0 %248
      %251 = vset.pattern.permute.xlu0 0
      %252 = vperm.xlu0 %251, %v222
      %v253 = vpop.permute.xlu0 %252
      %255 = vset.pattern.permute.xlu0 0
      %256 = vperm.xlu0 %255, %v226
      %v257 = vpop.permute.xlu0 %256
      %259 = vset.pattern.permute.xlu0 0
      %260 = vperm.xlu0 %259, %v230
      %v261 = vpop.permute.xlu0 %260
      %263 = vset.pattern.permute.xlu0 0
      %264 = vperm.xlu0 %263, %v234
      %v265 = vpop.permute.xlu0 %264
      %v267 = vmul.f32 %v171, %v237
      %v268 = vmul.f32 %v172, %v237
      %v269 = vmul.f32 %v173, %v241
      %v270 = vmul.f32 %v174, %v241
      %v271 = vmul.f32 %v175, %v245
      %v272 = vmul.f32 %v176, %v245
      %v273 = vmul.f32 %v177, %v249
      %v274 = vmul.f32 %v178, %v249
      %v275 = vmul.f32 %v179, %v253
      %v276 = vmul.f32 %v180, %v253
      %v277 = vmul.f32 %v181, %v257
      %v278 = vmul.f32 %v182, %v257
      %v279 = vmul.f32 %v183, %v261
      %v280 = vmul.f32 %v184, %v261
      %v281 = vmul.f32 %v185, %v265
      %v282 = vmul.f32 %v186, %v265
      %v283 = vld [vmem:[%s2] sm:$0x1]
      %v284 = vld [vmem:[%s2 + $0x1] sm:$0x1]
      %v285 = vld [vmem:[%s2 + $0x2] sm:$0x1]
      %v286 = vld [vmem:[%s2 + $0x3] sm:$0x1]
      %v287 = vld [vmem:[%s2 + $0x4] sm:$0x1]
      %v288 = vld [vmem:[%s2 + $0x5] sm:$0x1]
      %v289 = vld [vmem:[%s2 + $0x6] sm:$0x1]
      %v290 = vld [vmem:[%s2 + $0x7] sm:$0x1]
      %v299 = vlaneseq
      %v300 = vshrl.u32 %v299, 7
      %v301 = vsub.s32 0, %v300
      %v302 = vrot.slane %v283, %v301
      %v303 = vlaneseq
      %v304 = vshrl.u32 %v303, 7
      %v305 = vsub.s32 0, %v304
      %v306 = vrot.slane %v284, %v305
      %v307 = vlaneseq
      %v308 = vshrl.u32 %v307, 7
      %v309 = vsub.s32 0, %v308
      %v310 = vrot.slane %v285, %v309
      %v311 = vlaneseq
      %v312 = vshrl.u32 %v311, 7
      %v313 = vsub.s32 0, %v312
      %v314 = vrot.slane %v286, %v313
      %v315 = vlaneseq
      %v316 = vshrl.u32 %v315, 7
      %v317 = vsub.s32 0, %v316
      %v318 = vrot.slane %v287, %v317
      %v319 = vlaneseq
      %v320 = vshrl.u32 %v319, 7
      %v321 = vsub.s32 0, %v320
      %v322 = vrot.slane %v288, %v321
      %v323 = vlaneseq
      %v324 = vshrl.u32 %v323, 7
      %v325 = vsub.s32 0, %v324
      %v326 = vrot.slane %v289, %v325
      %v327 = vlaneseq
      %v328 = vshrl.u32 %v327, 7
      %v329 = vsub.s32 0, %v328
      %v330 = vrot.slane %v290, %v329
      %331 = vset.pattern.permute.xlu0 0
      %332 = vperm.xlu0 %331, %v302
      %v333 = vpop.permute.xlu0 %332
      %335 = vset.pattern.permute.xlu0 0
      %336 = vperm.xlu0 %335, %v306
      %v337 = vpop.permute.xlu0 %336
      %339 = vset.pattern.permute.xlu0 0
      %340 = vperm.xlu0 %339, %v310
      %v341 = vpop.permute.xlu0 %340
      %343 = vset.pattern.permute.xlu0 0
      %344 = vperm.xlu0 %343, %v314
      %v345 = vpop.permute.xlu0 %344
      %347 = vset.pattern.permute.xlu0 0
      %348 = vperm.xlu0 %347, %v318
      %v349 = vpop.permute.xlu0 %348
      %351 = vset.pattern.permute.xlu0 0
      %352 = vperm.xlu0 %351, %v322
      %v353 = vpop.permute.xlu0 %352
      %355 = vset.pattern.permute.xlu0 0
      %356 = vperm.xlu0 %355, %v326
      %v357 = vpop.permute.xlu0 %356
      %359 = vset.pattern.permute.xlu0 0
      %360 = vperm.xlu0 %359, %v330
      %v361 = vpop.permute.xlu0 %360
      %v363 = vadd.f32 %v267, %v333
      %v364 = vadd.f32 %v268, %v333
      %v365 = vadd.f32 %v269, %v337
      %v366 = vadd.f32 %v270, %v337
      %v367 = vadd.f32 %v271, %v341
      %v368 = vadd.f32 %v272, %v341
      %v369 = vadd.f32 %v273, %v345
      %v370 = vadd.f32 %v274, %v345
      %v371 = vadd.f32 %v275, %v349
      %v372 = vadd.f32 %v276, %v349
      %v373 = vadd.f32 %v277, %v353
      %v374 = vadd.f32 %v278, %v353
      %v375 = vadd.f32 %v279, %v357
      %v376 = vadd.f32 %v280, %v357
      %v377 = vadd.f32 %v281, %v361
      %v378 = vadd.f32 %v282, %v361
      %vm379 = vcmask 113664
      %380 = vst.msk [vmem:[%s170] sm:$0xff] %vm379, %v363
      %vm381 = vcmask 111616
      %382 = vst.msk [vmem:[%s170 + $0x8] sm:$0x3f] %vm381, %v364
      %383 = vst.msk [vmem:[%s170 + $0x10] sm:$0xff] %vm379, %v365
      %384 = vst.msk [vmem:[%s170 + $0x18] sm:$0x3f] %vm381, %v366
      %385 = vst.msk [vmem:[%s170 + $0x20] sm:$0xff] %vm379, %v367
      %386 = vst.msk [vmem:[%s170 + $0x28] sm:$0x3f] %vm381, %v368
      %387 = vst.msk [vmem:[%s170 + $0x30] sm:$0xff] %vm379, %v369
      %388 = vst.msk [vmem:[%s170 + $0x38] sm:$0x3f] %vm381, %v370
      %389 = vst.msk [vmem:[%s170 + $0x40] sm:$0xff] %vm379, %v371
      %390 = vst.msk [vmem:[%s170 + $0x48] sm:$0x3f] %vm381, %v372
      %391 = vst.msk [vmem:[%s170 + $0x50] sm:$0xff] %vm379, %v373
      %392 = vst.msk [vmem:[%s170 + $0x58] sm:$0x3f] %vm381, %v374
      %393 = vst.msk [vmem:[%s170 + $0x60] sm:$0xff] %vm379, %v375
      %394 = vst.msk [vmem:[%s170 + $0x68] sm:$0x3f] %vm381, %v376
      %395 = vst.msk [vmem:[%s170 + $0x70] sm:$0xff] %vm379, %v377
      %396 = vst.msk [vmem:[%s170 + $0x78] sm:$0x3f] %vm381, %v378
      %p397 = scmp.lt.s32.totalorder %s14, 1
      %s398 = scalar_select %p397, %s14, 1
      %s399 = smul.addr %s398, 16
      %s400 = smul.addr %s399, 8
      %s401 = scalar_lea.vmem %s3, %s400
      // Predicated region
      $region33: #{fac_conv_forward.3} parent=31 // pred_check
        %p402 = pneg %p100
      $region34: #{fac_conv_forward.3} parent=31 // pred_check_branch
        %404 = sbr.rel (%p402) target = $region36
      $region35: #{fac_conv_forward.3} parent=31 // pred_region
        _
      $region36: #{fac_conv_forward.3} parent=31 // pred_fallthru
        _
    $region32: #{fac_conv_forward.3} parent=5 // pred_fallthru
      _
    %p405 = scmp.le.s32.totalorder 2, %s9
    // Predicated region
    $region37: #{fac_conv_forward.3} parent=5 // pred_check
      %p406 = pneg %p405
    $region38: #{fac_conv_forward.3} parent=5 // pred_check_branch
      %408 = sbr.rel (%p406) target = $region40
    $region39: #{fac_conv_forward.3} parent=5 // pred_region
      %s409 = ssub.s32 %s9, 2
      // Predicated region
      $region41: #{fac_conv_forward.3} parent=39 // pred_check
        %p410 = pneg %p106
      $region42: #{fac_conv_forward.3} parent=39 // pred_check_branch
        %412 = sbr.rel (%p410) target = $region44
      $region43: #{fac_conv_forward.3} parent=39 // pred_region
        %p413 = scmp.lt.s32.totalorder %s15, 1
        %s414 = scalar_select %p413, %s15, 1
        %s415 = smul.addr %s414, 16
        %s416 = smul.addr %s415, 8
        %s417 = scalar_lea.vmem %s3, %s416
      $region44: #{fac_conv_forward.3} parent=39 // pred_fallthru
        _
    $region40: #{fac_conv_forward.3} parent=5 // pred_fallthru
      _
  $region6: #{fac_conv_forward.3} parent=0 // loop_footer
    %s13 = sadd.s32 1, %s9
  $region7: #{fac_conv_forward.3} parent=0 // loop_footer_branch
    %8 = sbr.rel target = $region3
  $region8: #{fac_conv_forward.3} parent=0 // loop_exit
    _

// kernel: fac_conv_forward.2
$region0: #{fac_conv_forward.2}
  #allocation0 [shape = 'u32[]', space=smem, size = 0x4, offset = 0x4, fixed_abs, tag = 'smem constant byte address 0x4 - core index']
  #allocation1 [shape = 'u32[144,128]{1,0:T(1,128)}', space=vmem, size = 0x12000, scoped, tag = 'internal scratch']
  %s0 = inlined_call_operand.vmem [shape: s32[2], index: 0, kind: input, shape index: {}]
  %s1 = inlined_call_operand.vmem [shape: f32[2,4,256], index: 1, kind: input, shape index: {}]
  %s2 = inlined_call_operand.vmem [shape: f32[3,16,8], index: 2, kind: input, shape index: {}]
  %s3 = inlined_call_operand.vmem [shape: f32[3,16,16], index: 3, kind: input, shape index: {}]
  %s4 = inlined_call_operand.vmem [shape: f32[2,8,224], index: 4, kind: output, shape index: {0}]
  %s5 = inlined_call_operand.vmem [shape: f32[2,8,1], index: 5, kind: output, shape index: {1}]
  %s6 = inlined_call_operand.vmem [shape: f32[2,8,1], index: 6, kind: output, shape index: {2}]
  %7 = xla_tuple %s4, %s5, %s6
  %s8 = sld [smem:[#allocation0]]
  $region69: #{fac_conv_forward.2} parent=0
    _
  %s10 = ssub.s32 1, %s8
  %s11 = scalar_select 0, %s10, %s8
  $region1: #{fac_conv_forward.2} parent=0
    #allocation2 [shape = 'u8[512]{0}', space=smem, size = 0x200, scoped, tag = 'input window, operand 0, single buffered']
    #allocation3 [shape = 's32[2]{0}', space=sflag, size = 0x8, scoped, tag = 'scoped memory for fac_conv_forward.2']
    %12 = vsyncpa [#allocation3], 0
    loop: start=0, step=1, limit=4
    $region2: #{fac_conv_forward.2} parent=1 // loop_pre_header
      _
    $region3: #{fac_conv_forward.2} parent=1 // loop_header
      %s14 = sphi 0, %s18
      %p15 = scmp.ge.s32.totalorder %s14, 4
      %s22 = sphi 0, %s22
      %s24 = sphi 0, %s22
      %s25 = sphi 0, %s24
      %s39 = sphi 0, %s25
      %s45 = sphi 0, %s47
      %s48 = sphi 0, %s45
      %s49 = sphi 0, %s48
      %s65 = sphi 0, %s49
      %s69 = sphi 0, %s69
      %s71 = sphi 0, %s69
      %s72 = sphi 0, %s71
      %s86 = sphi 0, %s72
      %s90 = sphi 0, %s90
      %s92 = sphi 0, %s90
      %s93 = sphi 0, %s92
      %s107 = sphi 0, %s93
      %s113 = sphi 0, %s115
      %s116 = sphi 0, %s113
      %s117 = sphi 0, %s116
      %s133 = sphi 0, %s117
      %s139 = sphi 0, %s141
      %s142 = sphi 0, %s139
      %s143 = sphi 0, %s142
      %s159 = sphi 0, %s143
      %s165 = sphi 0, %s167
      %s168 = sphi 0, %s165
      %s169 = sphi 0, %s168
      %s185 = sphi 0, %s169
    $region4: #{fac_conv_forward.2} parent=1 // loop_header_branch
      %17 = sbr.rel (%p15) target = $region8
    $region5: #{fac_conv_forward.2} parent=1 // loop_body
      %s19 = ssub.s32 %s14, 1
      %s20 = ssub.s32 %s14, 2
      %s21 = sadd.s32 %s14, 1
      %s23 = sadd.s32 %s22, 1
      %p26 = scmp.eq.s32.totalorder %s14, 1
      %p27 = scmp.ne.s32.totalorder %s22, %s24
      %p28 = scmp.eq.s32.totalorder %s14, 0
      %p29 = por %p27, %p28
      %p30 = scmp.ne.s32.totalorder %s22, %s24
      %p31 = scmp.eq.s32.totalorder %s19, 1
      %p32 = por %p30, %p31
      %p33 = scmp.ne.s32.totalorder %s24, %s25
      %p34 = scmp.eq.s32.totalorder %s19, 0
      %p35 = por %p33, %p34
      %p36 = scmp.ne.s32.totalorder %s24, %s25
      %p37 = scmp.eq.s32.totalorder %s20, 1
      %p38 = por %p36, %p37
      %p40 = scmp.ne.s32.totalorder %s25, %s39
      %p41 = scmp.eq.s32.totalorder %s20, 0
      %p42 = por %p40, %p41
      %s43 = ssub.s32 %s14, %s21
      %p44 = scmp.eq.s32.totalorder %s43, 0
      %s46 = sadd.s32 %s45, 1
      %s47 = scalar_select %p44, %s45, %s46
      %p50 = pneg %p44
      %p51 = scmp.eq.s32.totalorder %s14, 1
      %p52 = por %p50, %p51
      %p53 = scmp.ne.s32.totalorder %s45, %s48
      %p54 = scmp.eq.s32.totalorder %s14, 0
      %p55 = por %p53, %p54
      %p56 = scmp.ne.s32.totalorder %s45, %s48
      %p57 = scmp.eq.s32.totalorder %s19, 1
      %p58 = por %p56, %p57
      %p59 = scmp.ne.s32.totalorder %s48, %s49
      %p60 = scmp.eq.s32.totalorder %s19, 0
      %p61 = por %p59, %p60
      %p62 = scmp.ne.s32.totalorder %s48, %s49
      %p63 = scmp.eq.s32.totalorder %s20, 1
      %p64 = por %p62, %p63
      %p66 = scmp.ne.s32.totalorder %s49, %s65
      %p67 = scmp.eq.s32.totalorder %s20, 0
      %p68 = por %p66, %p67
      %s70 = sadd.s32 %s69, 1
      %p73 = scmp.eq.s32.totalorder %s14, 1
      %p74 = scmp.ne.s32.totalorder %s69, %s71
      %p75 = scmp.eq.s32.totalorder %s14, 0
      %p76 = por %p74, %p75
      %p77 = scmp.ne.s32.totalorder %s69, %s71
      %p78 = scmp.eq.s32.totalorder %s19, 1
      %p79 = por %p77, %p78
      %p80 = scmp.ne.s32.totalorder %s71, %s72
      %p81 = scmp.eq.s32.totalorder %s19, 0
      %p82 = por %p80, %p81
      %p83 = scmp.ne.s32.totalorder %s71, %s72
      %p84 = scmp.eq.s32.totalorder %s20, 1
      %p85 = por %p83, %p84
      %p87 = scmp.ne.s32.totalorder %s72, %s86
      %p88 = scmp.eq.s32.totalorder %s20, 0
      %p89 = por %p87, %p88
      %s91 = sadd.s32 %s90, 1
      %p94 = scmp.eq.s32.totalorder %s14, 1
      %p95 = scmp.ne.s32.totalorder %s90, %s92
      %p96 = scmp.eq.s32.totalorder %s14, 0
      %p97 = por %p95, %p96
      %p98 = scmp.ne.s32.totalorder %s90, %s92
      %p99 = scmp.eq.s32.totalorder %s19, 1
      %p100 = por %p98, %p99
      %p101 = scmp.ne.s32.totalorder %s92, %s93
      %p102 = scmp.eq.s32.totalorder %s19, 0
      %p103 = por %p101, %p102
      %p104 = scmp.ne.s32.totalorder %s92, %s93
      %p105 = scmp.eq.s32.totalorder %s20, 1
      %p106 = por %p104, %p105
      %p108 = scmp.ne.s32.totalorder %s93, %s107
      %p109 = scmp.eq.s32.totalorder %s20, 0
      %p110 = por %p108, %p109
      %s111 = ssub.s32 %s14, %s21
      %p112 = scmp.eq.s32.totalorder %s111, 0
      %s114 = sadd.s32 %s113, 1
      %s115 = scalar_select %p112, %s113, %s114
      %p118 = pneg %p112
      %p119 = scmp.eq.s32.totalorder %s14, 1
      %p120 = por %p118, %p119
      %p121 = scmp.ne.s32.totalorder %s113, %s116
      %p122 = scmp.eq.s32.totalorder %s14, 0
      %p123 = por %p121, %p122
      %p124 = scmp.ne.s32.totalorder %s113, %s116
      %p125 = scmp.eq.s32.totalorder %s19, 1
      %p126 = por %p124, %p125
      %p127 = scmp.ne.s32.totalorder %s116, %s117
      %p128 = scmp.eq.s32.totalorder %s19, 0
      %p129 = por %p127, %p128
      %p130 = scmp.ne.s32.totalorder %s116, %s117
      %p131 = scmp.eq.s32.totalorder %s20, 1
      %p132 = por %p130, %p131
      %p134 = scmp.ne.s32.totalorder %s117, %s133
      %p135 = scmp.eq.s32.totalorder %s20, 0
      %p136 = por %p134, %p135
      %s137 = ssub.s32 %s14, %s21
      %p138 = scmp.eq.s32.totalorder %s137, 0
      %s140 = sadd.s32 %s139, 1
      %s141 = scalar_select %p138, %s139, %s140
      %p144 = pneg %p138
      %p145 = scmp.eq.s32.totalorder %s14, 1
      %p146 = por %p144, %p145
      %p147 = scmp.ne.s32.totalorder %s139, %s142
      %p148 = scmp.eq.s32.totalorder %s14, 0
      %p149 = por %p147, %p148
      %p150 = scmp.ne.s32.totalorder %s139, %s142
      %p151 = scmp.eq.s32.totalorder %s19, 1
      %p152 = por %p150, %p151
      %p153 = scmp.ne.s32.totalorder %s142, %s143
      %p154 = scmp.eq.s32.totalorder %s19, 0
      %p155 = por %p153, %p154
      %p156 = scmp.ne.s32.totalorder %s142, %s143
      %p157 = scmp.eq.s32.totalorder %s20, 1
      %p158 = por %p156, %p157
      %p160 = scmp.ne.s32.totalorder %s143, %s159
      %p161 = scmp.eq.s32.totalorder %s20, 0
      %p162 = por %p160, %p161
      %s163 = ssub.s32 %s14, %s21
      %p164 = scmp.eq.s32.totalorder %s163, 0
      %s166 = sadd.s32 %s165, 1
      %s167 = scalar_select %p164, %s165, %s166
      %p170 = pneg %p164
      %p171 = scmp.eq.s32.totalorder %s14, 1
      %p172 = por %p170, %p171
      %p173 = scmp.ne.s32.totalorder %s165, %s168
      %p174 = scmp.eq.s32.totalorder %s14, 0
      %p175 = por %p173, %p174
      %p176 = scmp.ne.s32.totalorder %s165, %s168
      %p177 = scmp.eq.s32.totalorder %s19, 1
      %p178 = por %p176, %p177
      %p179 = scmp.ne.s32.totalorder %s168, %s169
      %p180 = scmp.eq.s32.totalorder %s19, 0
      %p181 = por %p179, %p180
      %p182 = scmp.ne.s32.totalorder %s168, %s169
      %p183 = scmp.eq.s32.totalorder %s20, 1
      %p184 = por %p182, %p183
      %p186 = scmp.ne.s32.totalorder %s169, %s185
      %p187 = scmp.eq.s32.totalorder %s20, 0
      %p188 = por %p186, %p187
      %p189 = scmp.le.s32.totalorder 1, %s14
      %p190 = scmp.lt.s32.totalorder %s14, 3
      %p191 = pnand %p189, %p190
      %p192 = pneg %p191
      // Predicated region
      $region9: #{fac_conv_forward.2} parent=5 // pred_check
        _
      $region10: #{fac_conv_forward.2} parent=5 // pred_check_branch
        %194 = sbr.rel (%p191) target = $region12
      $region11: #{fac_conv_forward.2} parent=5 // pred_region
        %s195 = ssub.s32 %s14, 1
        // Predicated region
        $region13: #{fac_conv_forward.2} parent=11 // pred_check
          %p196 = pneg %p35
        $region14: #{fac_conv_forward.2} parent=11 // pred_check_branch
          %198 = sbr.rel (%p196) target = $region16
        $region15: #{fac_conv_forward.2} parent=11 // pred_region
          %s200 = ssub.s32 16, 16
          %201 = vsyncadd [#allocation3], %s200
          %s203 = sshll.u32 %s0, 4
          %s204 = int_to_ptr.vmem [resolvable:$true] %s203
          %206 = dma.vmem_to_smem %s204, 16, [#allocation2], [#allocation3]
        $region16: #{fac_conv_forward.2} parent=11 // pred_fallthru
          _
        // Predicated region
        $region17: #{fac_conv_forward.2} parent=11 // pred_check
          %p207 = pneg %p82
        $region18: #{fac_conv_forward.2} parent=11 // pred_check_branch
          %209 = sbr.rel (%p207) target = $region20
        $region19: #{fac_conv_forward.2} parent=11 // pred_region
          _
        $region20: #{fac_conv_forward.2} parent=11 // pred_fallthru
          _
        // Predicated region
        $region21: #{fac_conv_forward.2} parent=11 // pred_check
          %p210 = pneg %p103
        $region22: #{fac_conv_forward.2} parent=11 // pred_check_branch
          %212 = sbr.rel (%p210) target = $region24
        $region23: #{fac_conv_forward.2} parent=11 // pred_region
          _
        $region24: #{fac_conv_forward.2} parent=11 // pred_fallthru
          _
      $region12: #{fac_conv_forward.2} parent=5 // pred_fallthru
        _
      %p213 = scmp.lt.s32.totalorder %s14, 2
      // Predicated region
      $region25: #{fac_conv_forward.2} parent=5 // pred_check
        %p214 = pneg %p213
      $region26: #{fac_conv_forward.2} parent=5 // pred_check_branch
        %216 = sbr.rel (%p214) target = $region28
      $region27: #{fac_conv_forward.2} parent=5 // pred_region
        // Predicated region
        $region29: #{fac_conv_forward.2} parent=27 // pred_check
          %p217 = pneg %p55
        $region30: #{fac_conv_forward.2} parent=27 // pred_check_branch
          %219 = sbr.rel (%p217) target = $region32
        $region31: #{fac_conv_forward.2} parent=27 // pred_region
          %p220 = scmp.lt.s32.totalorder %s14, 1
          %s221 = scalar_select %p220, %s14, 1
          %s222 = smul.addr %s221, 2
          %s223 = smul.addr %s222, 4
          %s224 = scalar_lea.vmem %s1, %s223
        $region32: #{fac_conv_forward.2} parent=27 // pred_fallthru
          _
      $region28: #{fac_conv_forward.2} parent=5 // pred_fallthru
        _
      %p225 = scmp.le.s32.totalorder 1, %s14
      %p226 = scmp.lt.s32.totalorder %s14, 3
      %p227 = pnand %p225, %p226
      %p228 = pneg %p227
      // Predicated region
      $region33: #{fac_conv_forward.2} parent=5 // pred_check
        _
      $region34: #{fac_conv_forward.2} parent=5 // pred_check_branch
        %230 = sbr.rel (%p227) target = $region36
      $region35: #{fac_conv_forward.2} parent=5 // pred_region
        %s231 = ssub.s32 %s14, 1
        // Predicated region
        $region37: #{fac_conv_forward.2} parent=35 // pred_check
          %p232 = pneg %p35
        $region38: #{fac_conv_forward.2} parent=35 // pred_check_branch
          %234 = sbr.rel (%p232) target = $region40
        $region39: #{fac_conv_forward.2} parent=35 // pred_region
          %235 = dma.done [#allocation3], 16
        $region40: #{fac_conv_forward.2} parent=35 // pred_fallthru
          _
        %236 = sfence
        %p237 = pneg %p35
        %p238 = pneg %p32
        %p239 = scmp.lt.s32.totalorder %s19, 1
        %s240 = scalar_select %p239, %s19, 1
        %s241 = smul.addr %s240, 2
        %s242 = smul.addr %s241, 4
        %s243 = scalar_lea.vmem %s1, %s242
        %p244 = pneg %p61
        %p245 = pneg %p58
        %p246 = pneg %p82
        %p247 = pneg %p79
        %p248 = pneg %p103
        %p249 = pneg %p100
        %p250 = pneg %p129
        %p251 = pneg %p126
        %p252 = scmp.lt.s32.totalorder %s19, 1
        %s253 = scalar_select %p252, %s19, 1
        %s254 = smul.addr %s253, 2
        %s255 = smul.addr %s254, 8
        %s256 = scalar_lea.vmem %s4, %s255
        %p257 = pneg %p155
        %p258 = pneg %p152
        %p259 = scmp.lt.s32.totalorder %s19, 1
        %s260 = scalar_select %p259, %s19, 1
        %s261 = smul.addr %s260, 8
        %s262 = scalar_lea.vmem %s5, %s261
        %p263 = pneg %p181
        %p264 = pneg %p178
        %p265 = scmp.lt.s32.totalorder %s19, 1
        %s266 = scalar_select %p265, %s19, 1
        %s267 = smul.addr %s266, 8
        %s268 = scalar_lea.vmem %s6, %s267
        %p269 = scmp.lt.s32.totalorder %s19, 1
        %s270 = scalar_select %p269, %s19, 1
        %s271 = smul.addr %s270, 2
        %s272 = smul.addr %s271, 4
        %s273 = scalar_lea.vmem %s1, %s272
        %p274 = scmp.lt.s32.totalorder %s19, 1
        %s275 = scalar_select %p274, %s19, 1
        %s276 = smul.addr %s275, 2
        %s277 = smul.addr %s276, 8
        %s278 = scalar_lea.vmem %s4, %s277
        %p279 = scmp.lt.s32.totalorder %s19, 1
        %s280 = scalar_select %p279, %s19, 1
        %s281 = smul.addr %s280, 8
        %s282 = scalar_lea.vmem %s5, %s281
        %p283 = scmp.lt.s32.totalorder %s19, 1
        %s284 = scalar_select %p283, %s19, 1
        %s285 = smul.addr %s284, 8
        %s286 = scalar_lea.vmem %s6, %s285
        %s287 = sld [smem:[#allocation2]]
        %s288 = sld [smem:[#allocation2 + $0x1]]
        %s289 = smul.u32 %s19, 3584
        %v290 = vld [vmem:[%s273] sm:$0xff]
        %v291 = vmax.f32 %v290, 0.0
        %v292 = vmul.f32 %v291, %v291
        %v294 = vcombine.high %v291, %v291
        %v297 = vcombine.low %v292, %v292
        %vm299 = vcmask 1043456
        %v300 = vsel %vm299, %v291, %v297
        %v301 = vsel %vm299, %v294, %v292
        %v302 = vld [vmem:[%s2] sm:$0xff]
        %v303 = vld [vmem:[%s2 + $0x8] sm:$0xff]
        %s304 = scalar_lea.vmem %s2, 16
        %v305 = vld [vmem:[%s304] sm:$0xff]
        %v306 = vld [vmem:[%s304 + $0x8] sm:$0xff]
        %309 = vrot.lane.b32.xlu0 %v300, 112
        %v310 = vpop.permute.xlu0 %309
        %311 = vrot.lane.b32.xlu0 %v301, 112
        %v312 = vpop.permute.xlu0 %311
        %vm313 = vcmask 916480
        %v314 = vsel %vm313, %v310, %v312
        %vm317 = vcmask 64512
        %v319 = vsel %vm317, %v305, 0
        %v322 = vsel %vm317, %v306, 0
        %324 = vmatprep.subr.mxu0 %v312
        %325 = vmatpush1.msra.mxu0 %v314
        %326 = vmatprep.subr.mxu0 0.0
        %327 = vmatpush1.msra.mxu0 0.0
        %328 = vmatprep.subr.mxu0 0.0
        %329 = vmatpush1.msra.mxu0 0.0
        %330 = vmatprep.subr.mxu0 0.0
        %331 = vmatpush1.msra.mxu0 0.0
        %332 = vmatprep.subr.mxu0 0.0
        %333 = vmatpush1.msra.mxu0 0.0
        %334 = vmatprep.subr.mxu0 0.0
        %335 = vmatpush1.msra.mxu0 0.0
        %336 = vmatprep.subr.mxu0 0.0
        %337 = vmatpush1.msra.mxu0 0.0
        %338 = vmatprep.subr.mxu0 0.0
        %339 = vmatpush1.msra.mxu0 0.0
        %340 = vmatprep.subr.mxu0 0.0
        %341 = vmatpush1.msra.mxu0 0.0
        %342 = vmatprep.subr.mxu0 0.0
        %343 = vmatpush1.msra.mxu0 0.0
        %344 = vmatprep.subr.mxu0 0.0
        %345 = vmatpush1.msra.mxu0 0.0
        %346 = vmatprep.subr.mxu0 0.0
        %347 = vmatpush1.msra.mxu0 0.0
        %348 = vmatprep.subr.mxu0 0.0
        %349 = vmatpush1.msra.mxu0 0.0
        %350 = vmatprep.subr.mxu0 0.0
        %351 = vmatpush1.msra.mxu0 0.0
        %352 = vmatprep.subr.mxu0 0.0
        %353 = vmatpush1.msra.mxu0 0.0
        %354 = vmatprep.subr.mxu0 0.0
        %355 = vmatpush1.msra.mxu0 0.0
        %356 = vmatprep.subr.mxu0 0.0
        %357 = vmatpush1.msra.mxu0 0.0
        %358 = vmatprep.subr.mxu0 0.0
        %359 = vmatpush1.msra.mxu0 0.0
        %360 = vmatprep.subr.mxu0 0.0
        %361 = vmatpush1.msra.mxu0 0.0
        %362 = vmatprep.subr.mxu0 0.0
        %363 = vmatpush1.msra.mxu0 0.0
        %364 = vmatprep.subr.mxu0 0.0
        %365 = vmatpush1.msra.mxu0 0.0
        %366 = vmatprep.subr.mxu0 0.0
        %367 = vmatpush1.msra.mxu0 0.0
        %368 = vmatprep.subr.mxu0 0.0
        %369 = vmatpush1.msra.mxu0 0.0
        %370 = vmatprep.subr.mxu0 0.0
        %371 = vmatpush1.msra.mxu0 0.0
        %372 = vmatprep.subr.mxu0 0.0
        %373 = vmatpush1.msra.mxu0 0.0
        %374 = vmatprep.subr.mxu0 0.0
        %375 = vmatpush1.msra.mxu0 0.0
        %376 = vmatprep.subr.mxu0 0.0
        %377 = vmatpush1.msra.mxu0 0.0
        %378 = vmatprep.subr.mxu0 0.0
        %379 = vmatpush1.msra.mxu0 0.0
        %380 = vmatprep.subr.mxu0 0.0
        %381 = vmatpush1.msra.mxu0 0.0
        %382 = vmatprep.subr.mxu0 0.0
        %383 = vmatpush1.msra.mxu0 0.0
        %384 = vmatprep.subr.mxu0 0.0
        %385 = vmatpush1.msra.mxu0 0.0
        %386 = vmatprep.subr.mxu0 0.0
        %387 = vmatpush1.msra.mxu0 0.0
        %388 = vmatprep.mubr.f32.mxu0 0.0
        %389 = vmatmul.mubr.f32.gmra.mrb[0].mxu0 %v319
        %v390 = vpop.f32.mrb[0].mxu0
        %v391 = vadd.f32 0.0, %v390
        %v392 = vpop.f32.mrb[0].mxu0
        %v393 = vadd.f32 0.0, %v392
        %394 = vmatprep.mubr.f32.mxu0 0.0
        %395 = vmatmul.mubr.f32.gmra.mrb[0].mxu0 %v322
        %v396 = vpop.f32.mrb[0].mxu0
        %v397 = vadd.f32 0.0, %v396
        %v398 = vpop.f32.mrb[0].mxu0
        %v399 = vadd.f32 0.0, %v398
        %400 = vdwg.mxu0
        %v402 = vsel %vm317, %v302, 0
        %v405 = vsel %vm317, %v303, 0
        %407 = vmatprep.subr.mxu0 %v301
        %408 = vmatpush1.msra.mxu0 %v300
        %409 = vmatprep.subr.mxu0 0.0
        %410 = vmatpush1.msra.mxu0 0.0
        %411 = vmatprep.subr.mxu0 0.0
        %412 = vmatpush1.msra.mxu0 0.0
        %413 = vmatprep.subr.mxu0 0.0
        %414 = vmatpush1.msra.mxu0 0.0
        %415 = vmatprep.subr.mxu0 0.0
        %416 = vmatpush1.msra.mxu0 0.0
        %417 = vmatprep.subr.mxu0 0.0
        %418 = vmatpush1.msra.mxu0 0.0
        %419 = vmatprep.subr.mxu0 0.0
        %420 = vmatpush1.msra.mxu0 0.0
        %421 = vmatprep.subr.mxu0 0.0
        %422 = vmatpush1.msra.mxu0 0.0
        %423 = vmatprep.subr.mxu0 0.0
        %424 = vmatpush1.msra.mxu0 0.0
        %425 = vmatprep.subr.mxu0 0.0
        %426 = vmatpush1.msra.mxu0 0.0
        %427 = vmatprep.subr.mxu0 0.0
        %428 = vmatpush1.msra.mxu0 0.0
        %429 = vmatprep.subr.mxu0 0.0
        %430 = vmatpush1.msra.mxu0 0.0
        %431 = vmatprep.subr.mxu0 0.0
        %432 = vmatpush1.msra.mxu0 0.0
        %433 = vmatprep.subr.mxu0 0.0
        %434 = vmatpush1.msra.mxu0 0.0
        %435 = vmatprep.subr.mxu0 0.0
        %436 = vmatpush1.msra.mxu0 0.0
        %437 = vmatprep.subr.mxu0 0.0
        %438 = vmatpush1.msra.mxu0 0.0
        %439 = vmatprep.subr.mxu0 0.0
        %440 = vmatpush1.msra.mxu0 0.0
        %441 = vmatprep.subr.mxu0 0.0
        %442 = vmatpush1.msra.mxu0 0.0
        %443 = vmatprep.subr.mxu0 0.0
        %444 = vmatpush1.msra.mxu0 0.0
        %445 = vmatprep.subr.mxu0 0.0
        %446 = vmatpush1.msra.mxu0 0.0
        %447 = vmatprep.subr.mxu0 0.0
        %448 = vmatpush1.msra.mxu0 0.0
        %449 = vmatprep.subr.mxu0 0.0
        %450 = vmatpush1.msra.mxu0 0.0
        %451 = vmatprep.subr.mxu0 0.0
        %452 = vmatpush1.msra.mxu0 0.0
        %453 = vmatprep.subr.mxu0 0.0
        %454 = vmatpush1.msra.mxu0 0.0
        %455 = vmatprep.subr.mxu0 0.0
        %456 = vmatpush1.msra.mxu0 0.0
        %457 = vmatprep.subr.mxu0 0.0
        %458 = vmatpush1.msra.mxu0 0.0
        %459 = vmatprep.subr.mxu0 0.0
        %460 = vmatpush1.msra.mxu0 0.0
        %461 = vmatprep.subr.mxu0 0.0
        %462 = vmatpush1.msra.mxu0 0.0
        %463 = vmatprep.subr.mxu0 0.0
        %464 = vmatpush1.msra.mxu0 0.0
        %465 = vmatprep.subr.mxu0 0.0
        %466 = vmatpush1.msra.mxu0 0.0
        %467 = vmatprep.subr.mxu0 0.0
        %468 = vmatpush1.msra.mxu0 0.0
        %469 = vmatprep.subr.mxu0 0.0
        %470 = vmatpush1.msra.mxu0 0.0
        %471 = vmatprep.mubr.f32.mxu0 0.0
        %472 = vmatmul.mubr.f32.gmra.mrb[0].mxu0 %v402
        %v473 = vpop.f32.mrb[0].mxu0
        %v474 = vadd.f32 %v391, %v473
        %v475 = vpop.f32.mrb[0].mxu0
        %v476 = vadd.f32 %v393, %v475
        %477 = vmatprep.mubr.f32.mxu0 0.0
        %478 = vmatmul.mubr.f32.gmra.mrb[0].mxu0 %v405
        %v479 = vpop.f32.mrb[0].mxu0
        %v480 = vadd.f32 %v397, %v479
        %v481 = vpop.f32.mrb[0].mxu0
        %v482 = vadd.f32 %v399, %v481
        %483 = vdwg.mxu0
        %s484 = scalar_lea.vmem %s2, 32
        %v485 = vld [vmem:[%s484] sm:$0xff]
        %v486 = vld [vmem:[%s484 + $0x8] sm:$0xff]
        %487 = vrot.lane.b32.xlu0 %v300, 96
        %v488 = vpop.permute.xlu0 %487
        %489 = vrot.lane.b32.xlu0 %v301, 96
        %v490 = vpop.permute.xlu0 %489
        %vm491 = vcmask 785408
        %v492 = vsel %vm491, %v488, %v490
        %v496 = vsel %vm317, %v485, 0
        %v499 = vsel %vm317, %v486, 0
        %501 = vmatprep.subr.mxu0 %v490
        %502 = vmatpush1.msra.mxu0 %v492
        %503 = vmatprep.subr.mxu0 0.0
        %504 = vmatpush1.msra.mxu0 0.0
        %505 = vmatprep.subr.mxu0 0.0
        %506 = vmatpush1.msra.mxu0 0.0
        %507 = vmatprep.subr.mxu0 0.0
        %508 = vmatpush1.msra.mxu0 0.0
        %509 = vmatprep.subr.mxu0 0.0
        %510 = vmatpush1.msra.mxu0 0.0
        %511 = vmatprep.subr.mxu0 0.0
        %512 = vmatpush1.msra.mxu0 0.0
        %513 = vmatprep.subr.mxu0 0.0
        %514 = vmatpush1.msra.mxu0 0.0
        %515 = vmatprep.subr.mxu0 0.0
        %516 = vmatpush1.msra.mxu0 0.0
        %517 = vmatprep.subr.mxu0 0.0
        %518 = vmatpush1.msra.mxu0 0.0
        %519 = vmatprep.subr.mxu0 0.0
        %520 = vmatpush1.msra.mxu0 0.0
        %521 = vmatprep.subr.mxu0 0.0
        %522 = vmatpush1.msra.mxu0 0.0
        %523 = vmatprep.subr.mxu0 0.0
        %524 = vmatpush1.msra.mxu0 0.0
        %525 = vmatprep.subr.mxu0 0.0
        %526 = vmatpush1.msra.mxu0 0.0
        %527 = vmatprep.subr.mxu0 0.0
        %528 = vmatpush1.msra.mxu0 0.0
        %529 = vmatprep.subr.mxu0 0.0
        %530 = vmatpush1.msra.mxu0 0.0
        %531 = vmatprep.subr.mxu0 0.0
        %532 = vmatpush1.msra.mxu0 0.0
        %533 = vmatprep.subr.mxu0 0.0
        %534 = vmatpush1.msra.mxu0 0.0
        %535 = vmatprep.subr.mxu0 0.0
        %536 = vmatpush1.msra.mxu0 0.0
        %537 = vmatprep.subr.mxu0 0.0
        %538 = vmatpush1.msra.mxu0 0.0
        %539 = vmatprep.subr.mxu0 0.0
        %540 = vmatpush1.msra.mxu0 0.0
        %541 = vmatprep.subr.mxu0 0.0
        %542 = vmatpush1.msra.mxu0 0.0
        %543 = vmatprep.subr.mxu0 0.0
        %544 = vmatpush1.msra.mxu0 0.0
        %545 = vmatprep.subr.mxu0 0.0
        %546 = vmatpush1.msra.mxu0 0.0
        %547 = vmatprep.subr.mxu0 0.0
        %548 = vmatpush1.msra.mxu0 0.0
        %549 = vmatprep.subr.mxu0 0.0
        %550 = vmatpush1.msra.mxu0 0.0
        %551 = vmatprep.subr.mxu0 0.0
        %552 = vmatpush1.msra.mxu0 0.0
        %553 = vmatprep.subr.mxu0 0.0
        %554 = vmatpush1.msra.mxu0 0.0
        %555 = vmatprep.subr.mxu0 0.0
        %556 = vmatpush1.msra.mxu0 0.0
        %557 = vmatprep.subr.mxu0 0.0
        %558 = vmatpush1.msra.mxu0 0.0
        %559 = vmatprep.subr.mxu0 0.0
        %560 = vmatpush1.msra.mxu0 0.0
        %561 = vmatprep.subr.mxu0 0.0
        %562 = vmatpush1.msra.mxu0 0.0
        %563 = vmatprep.subr.mxu0 0.0
        %564 = vmatpush1.msra.mxu0 0.0
        %565 = vmatprep.mubr.f32.mxu0 0.0
        %566 = vmatmul.mubr.f32.gmra.mrb[0].mxu0 %v496
        %v567 = vpop.f32.mrb[0].mxu0
        %v568 = vadd.f32 0.0, %v567
        %v569 = vpop.f32.mrb[0].mxu0
        %v570 = vadd.f32 0.0, %v569
        %571 = vmatprep.mubr.f32.mxu0 0.0
        %572 = vmatmul.mubr.f32.gmra.mrb[0].mxu0 %v499
        %v573 = vpop.f32.mrb[0].mxu0
        %v574 = vadd.f32 0.0, %v573
        %v575 = vpop.f32.mrb[0].mxu0
        %v576 = vadd.f32 0.0, %v575
        %577 = vdwg.mxu0
        %v578 = vadd.f32 %v474, %v568
        %v579 = vadd.f32 %v476, %v570
        %v580 = vadd.f32 %v480, %v574
        %v581 = vadd.f32 %v482, %v576
        %v582 = vlaneseq
        %v583 = vshrl.u32 %v582, 7
        %v584 = vlaneseq
        %v585 = vand.u32 %v584, 127
        %v586 = vadd.s32 %v585, 128
        %v587 = vmul.u32 %v583, 224
        %v588 = vstv %s289
        %v589 = vadd.s32 %v588, %v587
        %v590 = vadd.s32 %v589, %v585
        %v591 = vadd.s32 %v589, %v586
        %v592 = vstv %s287
        %v593 = vxor.u32 %v590, %v592
        %v594 = vxor.u32 %v591, %v592
        %v595 = vshrl.u32 %v593, 16
        %v596 = vshrl.u32 %v594, 16
        %v597 = vxor.u32 %v593, %v595
        %v598 = vxor.u32 %v594, %v596
        %v599 = vmul.u32 %v597, 2146121005
        %v600 = vmul.u32 %v598, 2146121005
        %v601 = vshrl.u32 %v599, 15
        %v602 = vshrl.u32 %v600, 15
        %v603 = vxor.u32 %v599, %v601
        %v604 = vxor.u32 %v600, %v602
        %v605 = vmul.u32 %v603, 2221713035
        %v606 = vmul.u32 %v604, 2221713035
        %v607 = vshrl.u32 %v605, 16
        %v608 = vshrl.u32 %v606, 16
        %v609 = vxor.u32 %v605, %v607
        %v610 = vxor.u32 %v606, %v608
        %v611 = vshrl.u32 %v609, 9
        %v612 = vshrl.u32 %v610, 9
        %v613 = vcvt.s32.f32 %v611
        %v614 = vcvt.s32.f32 %v612
        %v615 = vadd.f32 %v613, 0.5
        %v616 = vadd.f32 %v614, 0.5
        %v617 = vmul.f32 %v615, 1.1920929e-07
        %v618 = vmul.f32 %v616, 1.1920929e-07
        %v619 = vstv %s288
        %v620 = vxor.u32 %v590, %v619
        %v621 = vxor.u32 %v591, %v619
        %v622 = vshrl.u32 %v620, 16
        %v623 = vshrl.u32 %v621, 16
        %v624 = vxor.u32 %v620, %v622
        %v625 = vxor.u32 %v621, %v623
        %v626 = vmul.u32 %v624, 2146121005
        %v627 = vmul.u32 %v625, 2146121005
        %v628 = vshrl.u32 %v626, 15
        %v629 = vshrl.u32 %v627, 15
        %v630 = vxor.u32 %v626, %v628
        %v631 = vxor.u32 %v627, %v629
        %v632 = vmul.u32 %v630, 2221713035
        %v633 = vmul.u32 %v631, 2221713035
        %v634 = vshrl.u32 %v632, 16
        %v635 = vshrl.u32 %v633, 16
        %v636 = vxor.u32 %v632, %v634
        %v637 = vxor.u32 %v633, %v635
        %v638 = vshrl.u32 %v636, 9
        %v639 = vshrl.u32 %v637, 9
        %v640 = vcvt.s32.f32 %v638
        %v641 = vcvt.s32.f32 %v639
        %v642 = vadd.f32 %v640, 0.5
        %v643 = vadd.f32 %v641, 0.5
        %v644 = vmul.f32 %v642, 1.1920929e-07
        %v645 = vmul.f32 %v643, 1.1920929e-07
        %v646 = vlog2.pop %v617
        %v647 = vmul.f32 %v646, 0.6931472
        %v648 = vlog2.pop %v618
        %v649 = vmul.f32 %v648, 0.6931472
        %v650 = vmul.f32 %v647, -2.0
        %v651 = vmul.f32 %v649, -2.0
        %v652 = vrsqrt.pop %v650
        %v653 = vmul.f32 %v650, %v652
        %vm654 = vcmp.eq.f32.partialorder %v650, inf
        %v655 = vsel %vm654, %v650, %v653
        %vm656 = vcmp.eq.f32.partialorder %v650, 0.0
        %v657 = vand.u32 %v650, 2147483648
        %v658 = vsel %vm656, %v657, %v655
        %v659 = vrsqrt.pop %v651
        %v660 = vmul.f32 %v651, %v659
        %vm661 = vcmp.eq.f32.partialorder %v651, inf
        %v662 = vsel %vm661, %v651, %v660
        %vm663 = vcmp.eq.f32.partialorder %v651, 0.0
        %v664 = vand.u32 %v651, 2147483648
        %v665 = vsel %vm663, %v664, %v662
        %v666 = vmul.f32 %v644, 6.2831855
        %v667 = vmul.f32 %v645, 6.2831855
        %v668 = vand.u32 2147483647, %v666
        %vm669 = vcmp.le.f32.partialorder %v668, 0.7853982
        %vm670 = vcmp.lt.s32.totalorder %v666, 0
        %v671 = vand.u32 %v666, 2139095040
        %v672 = vshrl.u32 %v671, 23
        %v673 = vsub.s32 %v672, 127
        %v674 = vand.u32 2147483647, %v666
        %v675 = vand.u32 %v674, 8388607
        %v676 = vor.u32 %v675, 8388608
        %v677 = vsub.s32 0, %v676
        %v678 = vadd.s32 %v673, 1
        %vm679 = vcmp.gt.s32.totalorder %v678, 0
        %v680 = vsel %vm679, %v678, 0
        %v681 = vshrl.u32 %v680, 5
        %v682 = vand.u32 %v680, 31
        %v683 = vsub.s32 32, %v682
        %v684 = vshrl.u32 683565275, %v683
        %v685 = vshll.u32 683565275, %v682
        %v686 = vshrl.u32 2475754826, %v683
        %v687 = vor.u32 %v685, %v686
        %v688 = vshll.u32 2475754826, %v682
        %v689 = vshrl.u32 2131351028, %v683
        %v690 = vor.u32 %v688, %v689
        %v691 = vshll.u32 2131351028, %v682
        %v692 = vshrl.u32 2102212464, %v683
        %v693 = vor.u32 %v691, %v692
        %v694 = vshll.u32 2102212464, %v682
        %v695 = vshrl.u32 920167782, %v683
        %v696 = vor.u32 %v694, %v695
        %v697 = vshll.u32 920167782, %v682
        %v698 = vshrl.u32 1326507024, %v683
        %v699 = vor.u32 %v697, %v698
        %vm700 = vcmp.lt.s32.totalorder %v681, 1
        %vm701 = vcmp.lt.s32.totalorder %v681, 2
        %vm702 = vcmp.lt.s32.totalorder %v681, 3
        %vm703 = vcmp.lt.s32.totalorder %v681, 4
        %v704 = vsel %vm700, %v684, %v687
        %v705 = vsel %vm703, %v693, 2102212464
        %v706 = vsel %vm702, %v690, %v705
        %v707 = vsel %vm701, %v704, %v706
        %v708 = vsel %vm700, %v687, %v690
        %v709 = vsel %vm703, %v696, 920167782
        %v710 = vsel %vm702, %v693, %v709
        %v711 = vsel %vm701, %v708, %v710
        %v712 = vsel %vm700, %v690, %v693
        %v713 = vsel %vm703, %v699, 1326507024
        %v714 = vsel %vm702, %v696, %v713
        %v715 = vsel %vm701, %v712, %v714
        %v716 = vshll.u32 %v676, 8
        %v717 = vmul.u32.u64.compose %v716, %v715
        %v718 = vextract.low.u32 %v717
        %v719 = vextract.high.u32 %v717
        %v720 = vmul.u32.u64.compose %v716, %v711
        %v721 = vextract.low.u32 %v720
        %v722 = vextract.high.u32 %v720
        %v723 = vmul.u32 %v716, %v707
        %v724 = vadd.s32 %v719, %v721
        %vm725 = vc.u32 %v719, %v721
        %v726 = vadd.s32 %v722, 1
        %v727 = vsel %vm725, %v726, %v722
        %v728 = vadd.s32 %v723, %v727
        %v729 = vadd.s32 %v728, 536870912
        %v730 = vshrl.u32 %v729, 30
        %v731 = vshll.u32 %v730, 30
        %v732 = vsub.s32 %v728, %v731
        %vm733 = vcmp.lt.s32.totalorder %v732, 0
        %v734 = vsub.s32 0, %v732
        %v735 = vsel %vm733, %v734, %v732
        %v736 = vclz %v735
        %v737 = vsub.s32 %v736, 2
        %vm738 = vcmp.gt.s32.totalorder 0, %v737
        %v739 = vsel %vm738, 0, %v737
        %v740 = vsub.s32 32, %v739
        %v741 = vshll.u32 %v732, %v739
        %v742 = vshrl.u32 %v724, %v740
        %v743 = vor.u32 %v741, %v742
        %v744 = vsub.s32 4294967266, %v739
        %v745 = vadd.s32 %v744, 127
        %v746 = vshll.u32 %v745, 23
        %v747 = vor.u32 4788187, %v746
        %v748 = vand.u32 2147483647, %v747
        %v750 = vcvt.s32.f32 %v743
        %v751 = vmul.f32 %v750, %v748
        %v752 = vxor.u32 %v751, 2147483648
        %v753 = vsel %vm670, %v752, %v751
        %v754 = vsub.s32 4, %v730
        %v755 = vsel %vm670, %v754, %v730
        %v756 = vsel %vm669, %v666, %v753
        %v757 = vsel %vm669, 0, %v755
        %v758 = vcosq.f32.pop %v756
        %v759 = vsinq.f32.pop %v756
        %vm760 = vweird.f32 %v666
        %v761 = vand.u32 %v757, 3
        %vm762 = vcmp.lt.s32.totalorder %v761, 2
        %vm763 = vcmp.eq.s32.totalorder %v761, 0
        %v764 = vxor.u32 %v759, 2147483648
        %v765 = vsel %vm763, %v758, %v764
        %vm766 = vcmp.eq.s32.totalorder %v761, 2
        %v767 = vxor.u32 %v758, 2147483648
        %v768 = vsel %vm766, %v767, %v759
        %v769 = vsel %vm762, %v765, %v768
        %v770 = vsel %vm760, nan, %v769
        %v771 = vand.u32 2147483647, %v667
        %vm772 = vcmp.le.f32.partialorder %v771, 0.7853982
        %vm773 = vcmp.lt.s32.totalorder %v667, 0
        %v774 = vand.u32 %v667, 2139095040
        %v775 = vshrl.u32 %v774, 23
        %v776 = vsub.s32 %v775, 127
        %v777 = vand.u32 2147483647, %v667
        %v778 = vand.u32 %v777, 8388607
        %v779 = vor.u32 %v778, 8388608
        %v780 = vsub.s32 0, %v779
        %v781 = vadd.s32 %v776, 1
        %vm782 = vcmp.gt.s32.totalorder %v781, 0
        %v783 = vsel %vm782, %v781, 0
        %v784 = vshrl.u32 %v783, 5
        %v785 = vand.u32 %v783, 31
        %v786 = vsub.s32 32, %v785
        %v787 = vshrl.u32 683565275, %v786
        %v788 = vshll.u32 683565275, %v785
        %v789 = vshrl.u32 2475754826, %v786
        %v790 = vor.u32 %v788, %v789
        %v791 = vshll.u32 2475754826, %v785
        %v792 = vshrl.u32 2131351028, %v786
        %v793 = vor.u32 %v791, %v792
        %v794 = vshll.u32 2131351028, %v785
        %v795 = vshrl.u32 2102212464, %v786
        %v796 = vor.u32 %v794, %v795
        %v797 = vshll.u32 2102212464, %v785
        %v798 = vshrl.u32 920167782, %v786
        %v799 = vor.u32 %v797, %v798
        %v800 = vshll.u32 920167782, %v785
        %v801 = vshrl.u32 1326507024, %v786
        %v802 = vor.u32 %v800, %v801
        %vm803 = vcmp.lt.s32.totalorder %v784, 1
        %vm804 = vcmp.lt.s32.totalorder %v784, 2
        %vm805 = vcmp.lt.s32.totalorder %v784, 3
        %vm806 = vcmp.lt.s32.totalorder %v784, 4
        %v807 = vsel %vm803, %v787, %v790
        %v808 = vsel %vm806, %v796, 2102212464
        %v809 = vsel %vm805, %v793, %v808
        %v810 = vsel %vm804, %v807, %v809
        %v811 = vsel %vm803, %v790, %v793
        %v812 = vsel %vm806, %v799, 920167782
        %v813 = vsel %vm805, %v796, %v812
        %v814 = vsel %vm804, %v811, %v813
        %v815 = vsel %vm803, %v793, %v796
        %v816 = vsel %vm806, %v802, 1326507024
        %v817 = vsel %vm805, %v799, %v816
        %v818 = vsel %vm804, %v815, %v817
        %v819 = vshll.u32 %v779, 8
        %v820 = vmul.u32.u64.compose %v819, %v818
        %v821 = vextract.low.u32 %v820
        %v822 = vextract.high.u32 %v820
        %v823 = vmul.u32.u64.compose %v819, %v814
        %v824 = vextract.low.u32 %v823
        %v825 = vextract.high.u32 %v823
        %v826 = vmul.u32 %v819, %v810
        %v827 = vadd.s32 %v822, %v824
        %vm828 = vc.u32 %v822, %v824
        %v829 = vadd.s32 %v825, 1
        %v830 = vsel %vm828, %v829, %v825
        %v831 = vadd.s32 %v826, %v830
        %v832 = vadd.s32 %v831, 536870912
        %v833 = vshrl.u32 %v832, 30
        %v834 = vshll.u32 %v833, 30
        %v835 = vsub.s32 %v831, %v834
        %vm836 = vcmp.lt.s32.totalorder %v835, 0
        %v837 = vsub.s32 0, %v835
        %v838 = vsel %vm836, %v837, %v835
        %v839 = vclz %v838
        %v840 = vsub.s32 %v839, 2
        %vm841 = vcmp.gt.s32.totalorder 0, %v840
        %v842 = vsel %vm841, 0, %v840
        %v843 = vsub.s32 32, %v842
        %v844 = vshll.u32 %v835, %v842
        %v845 = vshrl.u32 %v827, %v843
        %v846 = vor.u32 %v844, %v845
        %v847 = vsub.s32 4294967266, %v842
        %v848 = vadd.s32 %v847, 127
        %v849 = vshll.u32 %v848, 23
        %v850 = vor.u32 4788187, %v849
        %v851 = vand.u32 2147483647, %v850
        %v853 = vcvt.s32.f32 %v846
        %v854 = vmul.f32 %v853, %v851
        %v855 = vxor.u32 %v854, 2147483648
        %v856 = vsel %vm773, %v855, %v854
        %v857 = vsub.s32 4, %v833
        %v858 = vsel %vm773, %v857, %v833
        %v859 = vsel %vm772, %v667, %v856
        %v860 = vsel %vm772, 0, %v858
        %v861 = vcosq.f32.pop %v859
        %v862 = vsinq.f32.pop %v859
        %vm863 = vweird.f32 %v667
        %v864 = vand.u32 %v860, 3
        %vm865 = vcmp.lt.s32.totalorder %v864, 2
        %vm866 = vcmp.eq.s32.totalorder %v864, 0
        %v867 = vxor.u32 %v862, 2147483648
        %v868 = vsel %vm866, %v861, %v867
        %vm869 = vcmp.eq.s32.totalorder %v864, 2
        %v870 = vxor.u32 %v861, 2147483648
        %v871 = vsel %vm869, %v870, %v862
        %v872 = vsel %vm865, %v868, %v871
        %v873 = vsel %vm863, nan, %v872
        %v874 = vmul.f32 %v658, %v770
        %v875 = vmul.f32 %v665, %v873
        %v876 = vadd.f32 %v580, 1e-08
        %v877 = vadd.f32 %v581, 1e-08
        %v878 = vrsqrt.pop %v876
        %v879 = vmul.f32 %v876, %v878
        %vm880 = vcmp.eq.f32.partialorder %v876, inf
        %v881 = vsel %vm880, %v876, %v879
        %vm882 = vcmp.eq.f32.partialorder %v876, 0.0
        %v883 = vand.u32 %v876, 2147483648
        %v884 = vsel %vm882, %v883, %v881
        %v885 = vrsqrt.pop %v877
        %v886 = vmul.f32 %v877, %v885
        %vm887 = vcmp.eq.f32.partialorder %v877, inf
        %v888 = vsel %vm887, %v877, %v886
        %vm889 = vcmp.eq.f32.partialorder %v877, 0.0
        %v890 = vand.u32 %v877, 2147483648
        %v891 = vsel %vm889, %v890, %v888
        %v892 = vmul.f32 %v884, %v874
        %v893 = vmul.f32 %v891, %v875
        %v894 = vadd.f32 %v578, %v892
        %v895 = vadd.f32 %v579, %v893
        %v896 = vmul.f32 %v894, %v894
        %v897 = vmul.f32 %v895, %v895
        %v898 = vld [vmem:[%s3] sm:$0xff]
        %v899 = vld [vmem:[%s3 + $0x8] sm:$0xff]
        %s900 = scalar_lea.vmem %s3, 16
        %v901 = vld [vmem:[%s900] sm:$0xff]
        %v902 = vld [vmem:[%s900 + $0x8] sm:$0xff]
        %907 = vrot.lane.b32.xlu0 %v894, 127
        %v908 = vpop.permute.xlu0 %907
        %909 = vrot.lane.b32.xlu0 %v895, 127
        %v910 = vpop.permute.xlu0 %909
        %911 = vrot.lane.b32.xlu0 %v896, 127
        %v912 = vpop.permute.xlu0 %911
        %913 = vrot.lane.b32.xlu0 %v897, 127
        %v914 = vpop.permute.xlu0 %913
        %vm915 = vcmask 1039360
        %v916 = vsel %vm915, %v908, %v910
        %v917 = vsel %vm915, %v912, %v914
        %922 = vrot.lane.b32.xlu0 %v894, 95
        %v923 = vpop.permute.xlu0 %922
        %924 = vrot.lane.b32.xlu0 %v896, 95
        %v925 = vpop.permute.xlu0 %924
        %vm928 = vcmask 777216
        %v929 = vsel %vm928, %v910, %v923
        %v930 = vsel %vm928, %v914, %v925
        %vm931 = vcmask 130048
        %v933 = vsel %vm931, %v901, 0
        %v936 = vsel %vm931, %v902, 0
        %938 = vmatprep.subr.mxu0 %v929
        %939 = vmatpush1.msra.mxu0 %v916
        %940 = vmatprep.subr.mxu0 %v930
        %941 = vmatpush1.msra.mxu0 %v917
        %942 = vmatprep.subr.mxu0 0.0
        %943 = vmatpush1.msra.mxu0 0.0
        %944 = vmatprep.subr.mxu0 0.0
        %945 = vmatpush1.msra.mxu0 0.0
        %946 = vmatprep.subr.mxu0 0.0
        %947 = vmatpush1.msra.mxu0 0.0
        %948 = vmatprep.subr.mxu0 0.0
        %949 = vmatpush1.msra.mxu0 0.0
        %950 = vmatprep.subr.mxu0 0.0
        %951 = vmatpush1.msra.mxu0 0.0
        %952 = vmatprep.subr.mxu0 0.0
        %953 = vmatpush1.msra.mxu0 0.0
        %954 = vmatprep.subr.mxu0 0.0
        %955 = vmatpush1.msra.mxu0 0.0
        %956 = vmatprep.subr.mxu0 0.0
        %957 = vmatpush1.msra.mxu0 0.0
        %958 = vmatprep.subr.mxu0 0.0
        %959 = vmatpush1.msra.mxu0 0.0
        %960 = vmatprep.subr.mxu0 0.0
        %961 = vmatpush1.msra.mxu0 0.0
        %962 = vmatprep.subr.mxu0 0.0
        %963 = vmatpush1.msra.mxu0 0.0
        %964 = vmatprep.subr.mxu0 0.0
        %965 = vmatpush1.msra.mxu0 0.0
        %966 = vmatprep.subr.mxu0 0.0
        %967 = vmatpush1.msra.mxu0 0.0
        %968 = vmatprep.subr.mxu0 0.0
        %969 = vmatpush1.msra.mxu0 0.0
        %970 = vmatprep.subr.mxu0 0.0
        %971 = vmatpush1.msra.mxu0 0.0
        %972 = vmatprep.subr.mxu0 0.0
        %973 = vmatpush1.msra.mxu0 0.0
        %974 = vmatprep.subr.mxu0 0.0
        %975 = vmatpush1.msra.mxu0 0.0
        %976 = vmatprep.subr.mxu0 0.0
        %977 = vmatpush1.msra.mxu0 0.0
        %978 = vmatprep.subr.mxu0 0.0
        %979 = vmatpush1.msra.mxu0 0.0
        %980 = vmatprep.subr.mxu0 0.0
        %981 = vmatpush1.msra.mxu0 0.0
        %982 = vmatprep.subr.mxu0 0.0
        %983 = vmatpush1.msra.mxu0 0.0
        %984 = vmatprep.subr.mxu0 0.0
        %985 = vmatpush1.msra.mxu0 0.0
        %986 = vmatprep.subr.mxu0 0.0
        %987 = vmatpush1.msra.mxu0 0.0
        %988 = vmatprep.subr.mxu0 0.0
        %989 = vmatpush1.msra.mxu0 0.0
        %990 = vmatprep.subr.mxu0 0.0
        %991 = vmatpush1.msra.mxu0 0.0
        %992 = vmatprep.subr.mxu0 0.0
        %993 = vmatpush1.msra.mxu0 0.0
        %994 = vmatprep.subr.mxu0 0.0
        %995 = vmatpush1.msra.mxu0 0.0
        %996 = vmatprep.subr.mxu0 0.0
        %997 = vmatpush1.msra.mxu0 0.0
        %998 = vmatprep.subr.mxu0 0.0
        %999 = vmatpush1.msra.mxu0 0.0
        %1000 = vmatprep.subr.mxu0 0.0
        %1001 = vmatpush1.msra.mxu0 0.0
        %1002 = vmatprep.mubr.f32.mxu0 0.0
        %1003 = vmatmul.mubr.f32.gmra.mrb[0].mxu0 %v933
        %v1004 = vpop.f32.mrb[0].mxu0
        %v1005 = vadd.f32 0.0, %v1004
        %v1006 = vpop.f32.mrb[0].mxu0
        %v1007 = vadd.f32 0.0, %v1006
        %1008 = vmatprep.mubr.f32.mxu0 0.0
        %1009 = vmatmul.mubr.f32.gmra.mrb[0].mxu0 %v936
        %v1010 = vpop.f32.mrb[0].mxu0
        %v1011 = vadd.f32 0.0, %v1010
        %v1012 = vpop.f32.mrb[0].mxu0
        %v1013 = vadd.f32 0.0, %v1012
        %1014 = vdwg.mxu0
        %v1016 = vsel %vm931, %v898, 0
        %v1019 = vsel %vm931, %v899, 0
        %1021 = vmatprep.subr.mxu0 %v895
        %1022 = vmatpush1.msra.mxu0 %v894
        %1023 = vmatprep.subr.mxu0 %v897
        %1024 = vmatpush1.msra.mxu0 %v896
        %1025 = vmatprep.subr.mxu0 0.0
        %1026 = vmatpush1.msra.mxu0 0.0
        %1027 = vmatprep.subr.mxu0 0.0
        %1028 = vmatpush1.msra.mxu0 0.0
        %1029 = vmatprep.subr.mxu0 0.0
        %1030 = vmatpush1.msra.mxu0 0.0
        %1031 = vmatprep.subr.mxu0 0.0
        %1032 = vmatpush1.msra.mxu0 0.0
        %1033 = vmatprep.subr.mxu0 0.0
        %1034 = vmatpush1.msra.mxu0 0.0
        %1035 = vmatprep.subr.mxu0 0.0
        %1036 = vmatpush1.msra.mxu0 0.0
        %1037 = vmatprep.subr.mxu0 0.0
        %1038 = vmatpush1.msra.mxu0 0.0
        %1039 = vmatprep.subr.mxu0 0.0
        %1040 = vmatpush1.msra.mxu0 0.0
        %1041 = vmatprep.subr.mxu0 0.0
        %1042 = vmatpush1.msra.mxu0 0.0
        %1043 = vmatprep.subr.mxu0 0.0
        %1044 = vmatpush1.msra.mxu0 0.0
        %1045 = vmatprep.subr.mxu0 0.0
        %1046 = vmatpush1.msra.mxu0 0.0
        %1047 = vmatprep.subr.mxu0 0.0
        %1048 = vmatpush1.msra.mxu0 0.0
        %1049 = vmatprep.subr.mxu0 0.0
        %1050 = vmatpush1.msra.mxu0 0.0
        %1051 = vmatprep.subr.mxu0 0.0
        %1052 = vmatpush1.msra.mxu0 0.0
        %1053 = vmatprep.subr.mxu0 0.0
        %1054 = vmatpush1.msra.mxu0 0.0
        %1055 = vmatprep.subr.mxu0 0.0
        %1056 = vmatpush1.msra.mxu0 0.0
        %1057 = vmatprep.subr.mxu0 0.0
        %1058 = vmatpush1.msra.mxu0 0.0
        %1059 = vmatprep.subr.mxu0 0.0
        %1060 = vmatpush1.msra.mxu0 0.0
        %1061 = vmatprep.subr.mxu0 0.0
        %1062 = vmatpush1.msra.mxu0 0.0
        %1063 = vmatprep.subr.mxu0 0.0
        %1064 = vmatpush1.msra.mxu0 0.0
        %1065 = vmatprep.subr.mxu0 0.0
        %1066 = vmatpush1.msra.mxu0 0.0
        %1067 = vmatprep.subr.mxu0 0.0
        %1068 = vmatpush1.msra.mxu0 0.0
        %1069 = vmatprep.subr.mxu0 0.0
        %1070 = vmatpush1.msra.mxu0 0.0
        %1071 = vmatprep.subr.mxu0 0.0
        %1072 = vmatpush1.msra.mxu0 0.0
        %1073 = vmatprep.subr.mxu0 0.0
        %1074 = vmatpush1.msra.mxu0 0.0
        %1075 = vmatprep.subr.mxu0 0.0
        %1076 = vmatpush1.msra.mxu0 0.0
        %1077 = vmatprep.subr.mxu0 0.0
        %1078 = vmatpush1.msra.mxu0 0.0
        %1079 = vmatprep.subr.mxu0 0.0
        %1080 = vmatpush1.msra.mxu0 0.0
        %1081 = vmatprep.subr.mxu0 0.0
        %1082 = vmatpush1.msra.mxu0 0.0
        %1083 = vmatprep.subr.mxu0 0.0
        %1084 = vmatpush1.msra.mxu0 0.0
        %1085 = vmatprep.mubr.f32.mxu0 0.0
        %1086 = vmatmul.mubr.f32.gmra.mrb[0].mxu0 %v1016
        %v1087 = vpop.f32.mrb[0].mxu0
        %v1088 = vadd.f32 %v1005, %v1087
        %v1089 = vpop.f32.mrb[0].mxu0
        %v1090 = vadd.f32 %v1007, %v1089
        %1091 = vmatprep.mubr.f32.mxu0 0.0
        %1092 = vmatmul.mubr.f32.gmra.mrb[0].mxu0 %v1019
        %v1093 = vpop.f32.mrb[0].mxu0
        %v1094 = vadd.f32 %v1011, %v1093
        %v1095 = vpop.f32.mrb[0].mxu0
        %v1096 = vadd.f32 %v1013, %v1095
        %1097 = vdwg.mxu0
        %s1098 = scalar_lea.vmem %s3, 32
        %v1099 = vld [vmem:[%s1098] sm:$0xff]
        %v1100 = vld [vmem:[%s1098 + $0x8] sm:$0xff]
        %1101 = vrot.lane.b32.xlu0 %v894, 126
        %v1102 = vpop.permute.xlu0 %1101
        %1103 = vrot.lane.b32.xlu0 %v895, 126
        %v1104 = vpop.permute.xlu0 %1103
        %1105 = vrot.lane.b32.xlu0 %v896, 126
        %v1106 = vpop.permute.xlu0 %1105
        %1107 = vrot.lane.b32.xlu0 %v897, 126
        %v1108 = vpop.permute.xlu0 %1107
        %vm1109 = vcmask 1031168
        %v1110 = vsel %vm1109, %v1102, %v1104
        %v1111 = vsel %vm1109, %v1106, %v1108
        %1116 = vrot.lane.b32.xlu0 %v894, 94
        %v1117 = vpop.permute.xlu0 %1116
        %1118 = vrot.lane.b32.xlu0 %v896, 94
        %v1119 = vpop.permute.xlu0 %1118
        %vm1122 = vcmask 769024
        %v1123 = vsel %vm1122, %v1104, %v1117
        %v1124 = vsel %vm1122, %v1108, %v1119
        %v1126 = vsel %vm931, %v1099, 0
        %v1129 = vsel %vm931, %v1100, 0
        %1131 = vmatprep.subr.mxu0 %v1123
        %1132 = vmatpush1.msra.mxu0 %v1110
        %1133 = vmatprep.subr.mxu0 %v1124
        %1134 = vmatpush1.msra.mxu0 %v1111
        %1135 = vmatprep.subr.mxu0 0.0
        %1136 = vmatpush1.msra.mxu0 0.0
        %1137 = vmatprep.subr.mxu0 0.0
        %1138 = vmatpush1.msra.mxu0 0.0
        %1139 = vmatprep.subr.mxu0 0.0
        %1140 = vmatpush1.msra.mxu0 0.0
        %1141 = vmatprep.subr.mxu0 0.0
        %1142 = vmatpush1.msra.mxu0 0.0
        %1143 = vmatprep.subr.mxu0 0.0
        %1144 = vmatpush1.msra.mxu0 0.0
        %1145 = vmatprep.subr.mxu0 0.0
        %1146 = vmatpush1.msra.mxu0 0.0
        %1147 = vmatprep.subr.mxu0 0.0
        %1148 = vmatpush1.msra.mxu0 0.0
        %1149 = vmatprep.subr.mxu0 0.0
        %1150 = vmatpush1.msra.mxu0 0.0
        %1151 = vmatprep.subr.mxu0 0.0
        %1152 = vmatpush1.msra.mxu0 0.0
        %1153 = vmatprep.subr.mxu0 0.0
        %1154 = vmatpush1.msra.mxu0 0.0
        %1155 = vmatprep.subr.mxu0 0.0
        %1156 = vmatpush1.msra.mxu0 0.0
        %1157 = vmatprep.subr.mxu0 0.0
        %1158 = vmatpush1.msra.mxu0 0.0
        %1159 = vmatprep.subr.mxu0 0.0
        %1160 = vmatpush1.msra.mxu0 0.0
        %1161 = vmatprep.subr.mxu0 0.0
        %1162 = vmatpush1.msra.mxu0 0.0
        %1163 = vmatprep.subr.mxu0 0.0
        %1164 = vmatpush1.msra.mxu0 0.0
        %1165 = vmatprep.subr.mxu0 0.0
        %1166 = vmatpush1.msra.mxu0 0.0
        %1167 = vmatprep.subr.mxu0 0.0
        %1168 = vmatpush1.msra.mxu0 0.0
        %1169 = vmatprep.subr.mxu0 0.0
        %1170 = vmatpush1.msra.mxu0 0.0
        %1171 = vmatprep.subr.mxu0 0.0
        %1172 = vmatpush1.msra.mxu0 0.0
        %1173 = vmatprep.subr.mxu0 0.0
        %1174 = vmatpush1.msra.mxu0 0.0
        %1175 = vmatprep.subr.mxu0 0.0
        %1176 = vmatpush1.msra.mxu0 0.0
        %1177 = vmatprep.subr.mxu0 0.0
        %1178 = vmatpush1.msra.mxu0 0.0
        %1179 = vmatprep.subr.mxu0 0.0
        %1180 = vmatpush1.msra.mxu0 0.0
        %1181 = vmatprep.subr.mxu0 0.0
        %1182 = vmatpush1.msra.mxu0 0.0
        %1183 = vmatprep.subr.mxu0 0.0
        %1184 = vmatpush1.msra.mxu0 0.0
        %1185 = vmatprep.subr.mxu0 0.0
        %1186 = vmatpush1.msra.mxu0 0.0
        %1187 = vmatprep.subr.mxu0 0.0
        %1188 = vmatpush1.msra.mxu0 0.0
        %1189 = vmatprep.subr.mxu0 0.0
        %1190 = vmatpush1.msra.mxu0 0.0
        %1191 = vmatprep.subr.mxu0 0.0
        %1192 = vmatpush1.msra.mxu0 0.0
        %1193 = vmatprep.subr.mxu0 0.0
        %1194 = vmatpush1.msra.mxu0 0.0
        %1195 = vmatprep.mubr.f32.mxu0 0.0
        %1196 = vmatmul.mubr.f32.gmra.mrb[0].mxu0 %v1126
        %v1197 = vpop.f32.mrb[0].mxu0
        %v1198 = vadd.f32 0.0, %v1197
        %v1199 = vpop.f32.mrb[0].mxu0
        %v1200 = vadd.f32 0.0, %v1199
        %1201 = vmatprep.mubr.f32.mxu0 0.0
        %1202 = vmatmul.mubr.f32.gmra.mrb[0].mxu0 %v1129
        %v1203 = vpop.f32.mrb[0].mxu0
        %v1204 = vadd.f32 0.0, %v1203
        %v1205 = vpop.f32.mrb[0].mxu0
        %v1206 = vadd.f32 0.0, %v1205
        %1207 = vdwg.mxu0
        %v1208 = vadd.f32 %v1088, %v1198
        %v1209 = vadd.f32 %v1090, %v1200
        %v1210 = vadd.f32 %v1094, %v1204
        %v1211 = vadd.f32 %v1096, %v1206
        %s1212 = sadd.s32 %s289, 1792
        %v1213 = vstv %s1212
        %v1214 = vadd.s32 %v1213, %v587
        %v1215 = vadd.s32 %v1214, %v585
        %v1216 = vadd.s32 %v1214, %v586
        %v1217 = vxor.u32 %v1215, %v592
        %v1218 = vxor.u32 %v1216, %v592
        %v1219 = vshrl.u32 %v1217, 16
        %v1220 = vshrl.u32 %v1218, 16
        %v1221 = vxor.u32 %v1217, %v1219
        %v1222 = vxor.u32 %v1218, %v1220
        %v1223 = vmul.u32 %v1221, 2146121005
        %v1224 = vmul.u32 %v1222, 2146121005
        %v1225 = vshrl.u32 %v1223, 15
        %v1226 = vshrl.u32 %v1224, 15
        %v1227 = vxor.u32 %v1223, %v1225
        %v1228 = vxor.u32 %v1224, %v1226
        %v1229 = vmul.u32 %v1227, 2221713035
        %v1230 = vmul.u32 %v1228, 2221713035
        %v1231 = vshrl.u32 %v1229, 16
        %v1232 = vshrl.u32 %v1230, 16
        %v1233 = vxor.u32 %v1229, %v1231
        %v1234 = vxor.u32 %v1230, %v1232
        %v1235 = vshrl.u32 %v1233, 9
        %v1236 = vshrl.u32 %v1234, 9
        %v1237 = vcvt.s32.f32 %v1235
        %v1238 = vcvt.s32.f32 %v1236
        %v1239 = vadd.f32 %v1237, 0.5
        %v1240 = vadd.f32 %v1238, 0.5
        %v1241 = vmul.f32 %v1239, 1.1920929e-07
        %v1242 = vmul.f32 %v1240, 1.1920929e-07
        %v1243 = vxor.u32 %v1215, %v619
        %v1244 = vxor.u32 %v1216, %v619
        %v1245 = vshrl.u32 %v1243, 16
        %v1246 = vshrl.u32 %v1244, 16
        %v1247 = vxor.u32 %v1243, %v1245
        %v1248 = vxor.u32 %v1244, %v1246
        %v1249 = vmul.u32 %v1247, 2146121005
        %v1250 = vmul.u32 %v1248, 2146121005
        %v1251 = vshrl.u32 %v1249, 15
        %v1252 = vshrl.u32 %v1250, 15
        %v1253 = vxor.u32 %v1249, %v1251
        %v1254 = vxor.u32 %v1250, %v1252
        %v1255 = vmul.u32 %v1253, 2221713035
        %v1256 = vmul.u32 %v1254, 2221713035
        %v1257 = vshrl.u32 %v1255, 16
        %v1258 = vshrl.u32 %v1256, 16
        %v1259 = vxor.u32 %v1255, %v1257
        %v1260 = vxor.u32 %v1256, %v1258
        %v1261 = vshrl.u32 %v1259, 9
        %v1262 = vshrl.u32 %v1260, 9
        %v1263 = vcvt.s32.f32 %v1261
        %v1264 = vcvt.s32.f32 %v1262
        %v1265 = vadd.f32 %v1263, 0.5
        %v1266 = vadd.f32 %v1264, 0.5
        %v1267 = vmul.f32 %v1265, 1.1920929e-07
        %v1268 = vmul.f32 %v1266, 1.1920929e-07
        %v1269 = vlog2.pop %v1241
        %v1270 = vmul.f32 %v1269, 0.6931472
        %v1271 = vlog2.pop %v1242
        %v1272 = vmul.f32 %v1271, 0.6931472
        %v1273 = vmul.f32 %v1270, -2.0
        %v1274 = vmul.f32 %v1272, -2.0
        %v1275 = vrsqrt.pop %v1273
        %v1276 = vmul.f32 %v1273, %v1275
        %vm1277 = vcmp.eq.f32.partialorder %v1273, inf
        %v1278 = vsel %vm1277, %v1273, %v1276
        %vm1279 = vcmp.eq.f32.partialorder %v1273, 0.0
        %v1280 = vand.u32 %v1273, 2147483648
        %v1281 = vsel %vm1279, %v1280, %v1278
        %v1282 = vrsqrt.pop %v1274
        %v1283 = vmul.f32 %v1274, %v1282
        %vm1284 = vcmp.eq.f32.partialorder %v1274, inf
        %v1285 = vsel %vm1284, %v1274, %v1283
        %vm1286 = vcmp.eq.f32.partialorder %v1274, 0.0
        %v1287 = vand.u32 %v1274, 2147483648
        %v1288 = vsel %vm1286, %v1287, %v1285
        %v1289 = vmul.f32 %v1267, 6.2831855
        %v1290 = vmul.f32 %v1268, 6.2831855
        %v1291 = vand.u32 2147483647, %v1289
        %vm1292 = vcmp.le.f32.partialorder %v1291, 0.7853982
        %vm1293 = vcmp.lt.s32.totalorder %v1289, 0
        %v1294 = vand.u32 %v1289, 2139095040
        %v1295 = vshrl.u32 %v1294, 23
        %v1296 = vsub.s32 %v1295, 127
        %v1297 = vand.u32 2147483647, %v1289
        %v1298 = vand.u32 %v1297, 8388607
        %v1299 = vor.u32 %v1298, 8388608
        %v1300 = vsub.s32 0, %v1299
        %v1301 = vadd.s32 %v1296, 1
        %vm1302 = vcmp.gt.s32.totalorder %v1301, 0
        %v1303 = vsel %vm1302, %v1301, 0
        %v1304 = vshrl.u32 %v1303, 5
        %v1305 = vand.u32 %v1303, 31
        %v1306 = vsub.s32 32, %v1305
        %v1307 = vshrl.u32 683565275, %v1306
        %v1308 = vshll.u32 683565275, %v1305
        %v1309 = vshrl.u32 2475754826, %v1306
        %v1310 = vor.u32 %v1308, %v1309
        %v1311 = vshll.u32 2475754826, %v1305
        %v1312 = vshrl.u32 2131351028, %v1306
        %v1313 = vor.u32 %v1311, %v1312
        %v1314 = vshll.u32 2131351028, %v1305
        %v1315 = vshrl.u32 2102212464, %v1306
        %v1316 = vor.u32 %v1314, %v1315
        %v1317 = vshll.u32 2102212464, %v1305
        %v1318 = vshrl.u32 920167782, %v1306
        %v1319 = vor.u32 %v1317, %v1318
        %v1320 = vshll.u32 920167782, %v1305
        %v1321 = vshrl.u32 1326507024, %v1306
        %v1322 = vor.u32 %v1320, %v1321
        %vm1323 = vcmp.lt.s32.totalorder %v1304, 1
        %vm1324 = vcmp.lt.s32.totalorder %v1304, 2
        %vm1325 = vcmp.lt.s32.totalorder %v1304, 3
        %vm1326 = vcmp.lt.s32.totalorder %v1304, 4
        %v1327 = vsel %vm1323, %v1307, %v1310
        %v1328 = vsel %vm1326, %v1316, 2102212464
        %v1329 = vsel %vm1325, %v1313, %v1328
        %v1330 = vsel %vm1324, %v1327, %v1329
        %v1331 = vsel %vm1323, %v1310, %v1313
        %v1332 = vsel %vm1326, %v1319, 920167782
        %v1333 = vsel %vm1325, %v1316, %v1332
        %v1334 = vsel %vm1324, %v1331, %v1333
        %v1335 = vsel %vm1323, %v1313, %v1316
        %v1336 = vsel %vm1326, %v1322, 1326507024
        %v1337 = vsel %vm1325, %v1319, %v1336
        %v1338 = vsel %vm1324, %v1335, %v1337
        %v1339 = vshll.u32 %v1299, 8
        %v1340 = vmul.u32.u64.compose %v1339, %v1338
        %v1341 = vextract.low.u32 %v1340
        %v1342 = vextract.high.u32 %v1340
        %v1343 = vmul.u32.u64.compose %v1339, %v1334
        %v1344 = vextract.low.u32 %v1343
        %v1345 = vextract.high.u32 %v1343
        %v1346 = vmul.u32 %v1339, %v1330
        %v1347 = vadd.s32 %v1342, %v1344
        %vm1348 = vc.u32 %v1342, %v1344
        %v1349 = vadd.s32 %v1345, 1
        %v1350 = vsel %vm1348, %v1349, %v1345
        %v1351 = vadd.s32 %v1346, %v1350
        %v1352 = vadd.s32 %v1351, 536870912
        %v1353 = vshrl.u32 %v1352, 30
        %v1354 = vshll.u32 %v1353, 30
        %v1355 = vsub.s32 %v1351, %v1354
        %vm1356 = vcmp.lt.s32.totalorder %v1355, 0
        %v1357 = vsub.s32 0, %v1355
        %v1358 = vsel %vm1356, %v1357, %v1355
        %v1359 = vclz %v1358
        %v1360 = vsub.s32 %v1359, 2
        %vm1361 = vcmp.gt.s32.totalorder 0, %v1360
        %v1362 = vsel %vm1361, 0, %v1360
        %v1363 = vsub.s32 32, %v1362
        %v1364 = vshll.u32 %v1355, %v1362
        %v1365 = vshrl.u32 %v1347, %v1363
        %v1366 = vor.u32 %v1364, %v1365
        %v1367 = vsub.s32 4294967266, %v1362
        %v1368 = vadd.s32 %v1367, 127
        %v1369 = vshll.u32 %v1368, 23
        %v1370 = vor.u32 4788187, %v1369
        %v1371 = vand.u32 2147483647, %v1370
        %v1373 = vcvt.s32.f32 %v1366
        %v1374 = vmul.f32 %v1373, %v1371
        %v1375 = vxor.u32 %v1374, 2147483648
        %v1376 = vsel %vm1293, %v1375, %v1374
        %v1377 = vsub.s32 4, %v1353
        %v1378 = vsel %vm1293, %v1377, %v1353
        %v1379 = vsel %vm1292, %v1289, %v1376
        %v1380 = vsel %vm1292, 0, %v1378
        %v1381 = vcosq.f32.pop %v1379
        %v1382 = vsinq.f32.pop %v1379
        %vm1383 = vweird.f32 %v1289
        %v1384 = vand.u32 %v1380, 3
        %vm1385 = vcmp.lt.s32.totalorder %v1384, 2
        %vm1386 = vcmp.eq.s32.totalorder %v1384, 0
        %v1387 = vxor.u32 %v1382, 2147483648
        %v1388 = vsel %vm1386, %v1381, %v1387
        %vm1389 = vcmp.eq.s32.totalorder %v1384, 2
        %v1390 = vxor.u32 %v1381, 2147483648
        %v1391 = vsel %vm1389, %v1390, %v1382
        %v1392 = vsel %vm1385, %v1388, %v1391
        %v1393 = vsel %vm1383, nan, %v1392
        %v1394 = vand.u32 2147483647, %v1290
        %vm1395 = vcmp.le.f32.partialorder %v1394, 0.7853982
        %vm1396 = vcmp.lt.s32.totalorder %v1290, 0
        %v1397 = vand.u32 %v1290, 2139095040
        %v1398 = vshrl.u32 %v1397, 23
        %v1399 = vsub.s32 %v1398, 127
        %v1400 = vand.u32 2147483647, %v1290
        %v1401 = vand.u32 %v1400, 8388607
        %v1402 = vor.u32 %v1401, 8388608
        %v1403 = vsub.s32 0, %v1402
        %v1404 = vadd.s32 %v1399, 1
        %vm1405 = vcmp.gt.s32.totalorder %v1404, 0
        %v1406 = vsel %vm1405, %v1404, 0
        %v1407 = vshrl.u32 %v1406, 5
        %v1408 = vand.u32 %v1406, 31
        %v1409 = vsub.s32 32, %v1408
        %v1410 = vshrl.u32 683565275, %v1409
        %v1411 = vshll.u32 683565275, %v1408
        %v1412 = vshrl.u32 2475754826, %v1409
        %v1413 = vor.u32 %v1411, %v1412
        %v1414 = vshll.u32 2475754826, %v1408
        %v1415 = vshrl.u32 2131351028, %v1409
        %v1416 = vor.u32 %v1414, %v1415
        %v1417 = vshll.u32 2131351028, %v1408
        %v1418 = vshrl.u32 2102212464, %v1409
        %v1419 = vor.u32 %v1417, %v1418
        %v1420 = vshll.u32 2102212464, %v1408
        %v1421 = vshrl.u32 920167782, %v1409
        %v1422 = vor.u32 %v1420, %v1421
        %v1423 = vshll.u32 920167782, %v1408
        %v1424 = vshrl.u32 1326507024, %v1409
        %v1425 = vor.u32 %v1423, %v1424
        %vm1426 = vcmp.lt.s32.totalorder %v1407, 1
        %vm1427 = vcmp.lt.s32.totalorder %v1407, 2
        %vm1428 = vcmp.lt.s32.totalorder %v1407, 3
        %vm1429 = vcmp.lt.s32.totalorder %v1407, 4
        %v1430 = vsel %vm1426, %v1410, %v1413
        %v1431 = vsel %vm1429, %v1419, 2102212464
        %v1432 = vsel %vm1428, %v1416, %v1431
        %v1433 = vsel %vm1427, %v1430, %v1432
        %v1434 = vsel %vm1426, %v1413, %v1416
        %v1435 = vsel %vm1429, %v1422, 920167782
        %v1436 = vsel %vm1428, %v1419, %v1435
        %v1437 = vsel %vm1427, %v1434, %v1436
        %v1438 = vsel %vm1426, %v1416, %v1419
        %v1439 = vsel %vm1429, %v1425, 1326507024
        %v1440 = vsel %vm1428, %v1422, %v1439
        %v1441 = vsel %vm1427, %v1438, %v1440
        %v1442 = vshll.u32 %v1402, 8
        %v1443 = vmul.u32.u64.compose %v1442, %v1441
        %v1444 = vextract.low.u32 %v1443
        %v1445 = vextract.high.u32 %v1443
        %v1446 = vmul.u32.u64.compose %v1442, %v1437
        %v1447 = vextract.low.u32 %v1446
        %v1448 = vextract.high.u32 %v1446
        %v1449 = vmul.u32 %v1442, %v1433
        %v1450 = vadd.s32 %v1445, %v1447
        %vm1451 = vc.u32 %v1445, %v1447
        %v1452 = vadd.s32 %v1448, 1
        %v1453 = vsel %vm1451, %v1452, %v1448
        %v1454 = vadd.s32 %v1449, %v1453
        %v1455 = vadd.s32 %v1454, 536870912
        %v1456 = vshrl.u32 %v1455, 30
        %v1457 = vshll.u32 %v1456, 30
        %v1458 = vsub.s32 %v1454, %v1457
        %vm1459 = vcmp.lt.s32.totalorder %v1458, 0
        %v1460 = vsub.s32 0, %v1458
        %v1461 = vsel %vm1459, %v1460, %v1458
        %v1462 = vclz %v1461
        %v1463 = vsub.s32 %v1462, 2
        %vm1464 = vcmp.gt.s32.totalorder 0, %v1463
        %v1465 = vsel %vm1464, 0, %v1463
        %v1466 = vsub.s32 32, %v1465
        %v1467 = vshll.u32 %v1458, %v1465
        %v1468 = vshrl.u32 %v1450, %v1466
        %v1469 = vor.u32 %v1467, %v1468
        %v1470 = vsub.s32 4294967266, %v1465
        %v1471 = vadd.s32 %v1470, 127
        %v1472 = vshll.u32 %v1471, 23
        %v1473 = vor.u32 4788187, %v1472
        %v1474 = vand.u32 2147483647, %v1473
        %v1476 = vcvt.s32.f32 %v1469
        %v1477 = vmul.f32 %v1476, %v1474
        %v1478 = vxor.u32 %v1477, 2147483648
        %v1479 = vsel %vm1396, %v1478, %v1477
        %v1480 = vsub.s32 4, %v1456
        %v1481 = vsel %vm1396, %v1480, %v1456
        %v1482 = vsel %vm1395, %v1290, %v1479
        %v1483 = vsel %vm1395, 0, %v1481
        %v1484 = vcosq.f32.pop %v1482
        %v1485 = vsinq.f32.pop %v1482
        %vm1486 = vweird.f32 %v1290
        %v1487 = vand.u32 %v1483, 3
        %vm1488 = vcmp.lt.s32.totalorder %v1487, 2
        %vm1489 = vcmp.eq.s32.totalorder %v1487, 0
        %v1490 = vxor.u32 %v1485, 2147483648
        %v1491 = vsel %vm1489, %v1484, %v1490
        %vm1492 = vcmp.eq.s32.totalorder %v1487, 2
        %v1493 = vxor.u32 %v1484, 2147483648
        %v1494 = vsel %vm1492, %v1493, %v1485
        %v1495 = vsel %vm1488, %v1491, %v1494
        %v1496 = vsel %vm1486, nan, %v1495
        %v1497 = vmul.f32 %v1281, %v1393
        %v1498 = vmul.f32 %v1288, %v1496
        %v1499 = vadd.f32 %v1210, 1e-08
        %v1500 = vadd.f32 %v1211, 1e-08
        %v1501 = vrsqrt.pop %v1499
        %v1502 = vmul.f32 %v1499, %v1501
        %vm1503 = vcmp.eq.f32.partialorder %v1499, inf
        %v1504 = vsel %vm1503, %v1499, %v1502
        %vm1505 = vcmp.eq.f32.partialorder %v1499, 0.0
        %v1506 = vand.u32 %v1499, 2147483648
        %v1507 = vsel %vm1505, %v1506, %v1504
        %v1508 = vrsqrt.pop %v1500
        %v1509 = vmul.f32 %v1500, %v1508
        %vm1510 = vcmp.eq.f32.partialorder %v1500, inf
        %v1511 = vsel %vm1510, %v1500, %v1509
        %vm1512 = vcmp.eq.f32.partialorder %v1500, 0.0
        %v1513 = vand.u32 %v1500, 2147483648
        %v1514 = vsel %vm1512, %v1513, %v1511
        %v1515 = vmul.f32 %v1507, %v1497
        %v1516 = vmul.f32 %v1514, %v1498
        %v1517 = vadd.f32 %v1208, %v1515
        %v1518 = vadd.f32 %v1209, %v1516
        %1519 = vst [vmem:[%s278] sm:$0xff] %v1517
        %1520 = vst.msk [vmem:[%s278 + $0x8] sm:$0xff] %vm491, %v1518
        %vm1521 = vcmp.lt.s32.totalorder %v585, 0
        %v1522 = vsub.s32 0, %v585
        %v1523 = vsel %vm1521, %v1522, %v585
        %v1524 = vshrl.u32 %v1523, 4
        %v1525 = vand.u32 %v1523, 15
        %v1526 = vsub.s32 0, %v1525
        %v1527 = vsel %vm1521, %v1526, %v1525
        %vm1528 = vcmp.lt.s32.totalorder %v586, 0
        %v1529 = vsub.s32 0, %v586
        %v1530 = vsel %vm1528, %v1529, %v586
        %v1531 = vshrl.u32 %v1530, 4
        %v1532 = vand.u32 %v1530, 15
        %v1533 = vsub.s32 0, %v1532
        %v1534 = vsel %vm1528, %v1533, %v1532
        %vm1535 = vcmp.ne.s32.totalorder %v1527, 0
        %vm1536 = vcmp.ne.s32.totalorder %v1534, 0
        %vm1537 = vcmp.lt.s32.totalorder %v1527, 0
        %vm1538 = vcmp.lt.s32.totalorder %v1534, 0
        %vm1539 = vmand %vm1537, %vm1535
        %vm1540 = vmand %vm1538, %vm1536
        %v1541 = vadd.s32 %v1527, 16
        %v1542 = vadd.s32 %v1534, 16
        %v1543 = vsel %vm1539, %v1541, %v1527
        %v1544 = vsel %vm1540, %v1542, %v1534
        %vm1545 = vcmp.lt.s32.totalorder %v1543, 14
        %vm1546 = vcmp.lt.s32.totalorder %v1544, 14
        %v1547 = vsel %vm1545, %v1517, 0.0
        %v1548 = vsel %vm1546, %v1518, 0.0
        %v1549 = vsel %vm491, %v1548, 0.0
        %v1550 = vadd.f32 %v1547, %v1549
        %1551 = vadd.xlane.f32.xlu0 %v1550
        %v1552 = vpop.xlane.xlu0 %1551
        %vm1553 = vcmask 7168
        %1554 = vst.msk [vmem:[%s282] sm:$0xff] %vm1553, %v1552
        %v1555 = vmul.f32 %v1547, %v1547
        %v1556 = vmul.f32 %v1548, %v1548
        %v1557 = vsel %vm491, %v1556, 0.0
        %v1558 = vadd.f32 %v1555, %v1557
        %1559 = vadd.xlane.f32.xlu0 %v1558
        %v1560 = vpop.xlane.xlu0 %1559
        %1561 = vst.msk [vmem:[%s286] sm:$0xff] %vm1553, %v1560
        %p1562 = scmp.lt.s32.totalorder %s19, 1
        %s1563 = scalar_select %p1562, %s19, 1
        %s1564 = smul.addr %s1563, 2
        %s1565 = smul.addr %s1564, 8
        %s1566 = scalar_lea.vmem %s4, %s1565
        %p1567 = scmp.lt.s32.totalorder %s19, 1
        %s1568 = scalar_select %p1567, %s19, 1
        %s1569 = smul.addr %s1568, 8
        %s1570 = scalar_lea.vmem %s5, %s1569
        %p1571 = scmp.lt.s32.totalorder %s19, 1
        %s1572 = scalar_select %p1571, %s19, 1
        %s1573 = smul.addr %s1572, 8
        %s1574 = scalar_lea.vmem %s6, %s1573
        // Predicated region
        $region41: #{fac_conv_forward.2} parent=35 // pred_check
          %p1575 = pneg %p126
        $region42: #{fac_conv_forward.2} parent=35 // pred_check_branch
          %1577 = sbr.rel (%p1575) target = $region44
        $region43: #{fac_conv_forward.2} parent=35 // pred_region
          _
        $region44: #{fac_conv_forward.2} parent=35 // pred_fallthru
          _
        // Predicated region
        $region45: #{fac_conv_forward.2} parent=35 // pred_check
          %p1578 = pneg %p152
        $region46: #{fac_conv_forward.2} parent=35 // pred_check_branch
          %1580 = sbr.rel (%p1578) target = $region48
        $region47: #{fac_conv_forward.2} parent=35 // pred_region
          _
        $region48: #{fac_conv_forward.2} parent=35 // pred_fallthru
          _
        // Predicated region
        $region49: #{fac_conv_forward.2} parent=35 // pred_check
          %p1581 = pneg %p178
        $region50: #{fac_conv_forward.2} parent=35 // pred_check_branch
          %1583 = sbr.rel (%p1581) target = $region52
        $region51: #{fac_conv_forward.2} parent=35 // pred_region
          _
        $region52: #{fac_conv_forward.2} parent=35 // pred_fallthru
          _
      $region36: #{fac_conv_forward.2} parent=5 // pred_fallthru
        _
      %p1584 = scmp.le.s32.totalorder 2, %s14
      // Predicated region
      $region53: #{fac_conv_forward.2} parent=5 // pred_check
        %p1585 = pneg %p1584
      $region54: #{fac_conv_forward.2} parent=5 // pred_check_branch
        %1587 = sbr.rel (%p1585) target = $region56
      $region55: #{fac_conv_forward.2} parent=5 // pred_region
        %s1588 = ssub.s32 %s14, 2
        // Predicated region
        $region57: #{fac_conv_forward.2} parent=55 // pred_check
          %p1589 = pneg %p132
        $region58: #{fac_conv_forward.2} parent=55 // pred_check_branch
          %1591 = sbr.rel (%p1589) target = $region60
        $region59: #{fac_conv_forward.2} parent=55 // pred_region
          %p1592 = scmp.lt.s32.totalorder %s20, 1
          %s1593 = scalar_select %p1592, %s20, 1
          %s1594 = smul.addr %s1593, 2
          %s1595 = smul.addr %s1594, 8
          %s1596 = scalar_lea.vmem %s4, %s1595
        $region60: #{fac_conv_forward.2} parent=55 // pred_fallthru
          _
        // Predicated region
        $region61: #{fac_conv_forward.2} parent=55 // pred_check
          %p1597 = pneg %p158
        $region62: #{fac_conv_forward.2} parent=55 // pred_check_branch
          %1599 = sbr.rel (%p1597) target = $region64
        $region63: #{fac_conv_forward.2} parent=55 // pred_region
          %p1600 = scmp.lt.s32.totalorder %s20, 1
          %s1601 = scalar_select %p1600, %s20, 1
          %s1602 = smul.addr %s1601, 8
          %s1603 = scalar_lea.vmem %s5, %s1602
        $region64: #{fac_conv_forward.2} parent=55 // pred_fallthru
          _
        // Predicated region
        $region65: #{fac_conv_forward.2} parent=55 // pred_check
          %p1604 = pneg %p184
        $region66: #{fac_conv_forward.2} parent=55 // pred_check_branch
          %1606 = sbr.rel (%p1604) target = $region68
        $region67: #{fac_conv_forward.2} parent=55 // pred_region
          %p1607 = scmp.lt.s32.totalorder %s20, 1
          %s1608 = scalar_select %p1607, %s20, 1
          %s1609 = smul.addr %s1608, 8
          %s1610 = scalar_lea.vmem %s6, %s1609
        $region68: #{fac_conv_forward.2} parent=55 // pred_fallthru
          _
      $region56: #{fac_conv_forward.2} parent=5 // pred_fallthru
        _
    $region6: #{fac_conv_forward.2} parent=1 // loop_footer
      %s18 = sadd.s32 1, %s14
    $region7: #{fac_conv_forward.2} parent=1 // loop_footer_branch
      %13 = sbr.rel target = $region3
    $region8: #{fac_conv_forward.2} parent=1 // loop_exit
      _
    %1611 = vsyncpa [#allocation3], 1
    %s1612 = scalar_lea.sflag [#allocation3], 1
    %1613 = vsyncpa %s1612, 1

</llo_original>
